<compile_context>
chip_gen: v5e
topology: v5e:2x2
jax: 0.10.0
libtpu: 0.0.40
codegen_flags: <defaults>
</compile_context>

<pallas_src>
import jax
import jax.numpy as jnp
from jax import lax
from jax.experimental import pallas as pl
from jax.experimental.pallas import tpu as pltpu
import numpy as np


# ----------------------------- Pallas kernel --------------------------------

def _transformer_kernel(sup_ref, que_ref, mask_ref, rqs_ref, att_ref):
    bb = sup_ref.shape[0]   # static per-step batch tile

    # Static unrolled loop over the samples in this batch tile; each sample is
    # an independent 2-D problem (proven lowering path, bounded live ranges:
    # results are stored to the output refs inside each iteration).
    for b in range(bb):
        sup = sup_ref[b].astype(jnp.float32)     # (C, N)
        que = que_ref[b].astype(jnp.float32)     # (C, N)
        msk = mask_ref[b].astype(jnp.float32)    # (1, N)

        # per-pixel inverse L2 norm over the channel dim (EUP rsqrt, no MXU)
        inv_qn = lax.rsqrt(jnp.sum(que * que, axis=0, keepdims=True) + 1e-12)  # (1, N)
        inv_sn = lax.rsqrt(jnp.sum(sup * sup, axis=0, keepdims=True) + 1e-12)  # (1, N)

        # fold the query inverse norm into que (lane-aligned VPU broadcast)
        que_hat = que * inv_qn                                                  # (C, N)

        # x_qs = que^T @ sup contracted over channels -> (N, N)   [one MXU pass]
        qs = lax.dot_general(que_hat, sup, (((0,), (0,)), ((), ())),
                             preferred_element_type=jnp.float32)                # (N, N)

        # fold the support inverse norm (lane-aligned broadcast) -> cosine sim
        rqs = qs * inv_sn                                                       # (N, N)
        rqs_ref[b] = rqs.astype(rqs_ref.dtype)

        # generalized inverse of the 1xN mask row:  gene = mask^T / (mask mask^T + 1e-5)
        denom = jnp.sum(msk * msk) + 1e-5

        # lane-dense attention row without touching the (N,N) matrix again:
        #   att[i] = (1/denom) * sum_j rqs[i,j] * mask[j]
        #          = (1/denom) * sum_c que_hat[c,i] * w[c]
        w = jnp.sum(sup * (inv_sn * msk), axis=1, keepdims=True)                # (C, 1)
        att = jnp.sum(que_hat * w, axis=0, keepdims=True) / denom               # (1, N)

        # cam_normalize: per-sample min-max over the spatial map
        a_min = jnp.min(att)
        a_max = jnp.max(att)
        att_ref[b] = ((att - a_min) / (a_max - a_min + 1e-5)).astype(att_ref.dtype)


# ----------------------------- glue (plain JAX) ------------------------------

def bilinear_resize_nchw(x, out_h, out_w):
    """F.interpolate(x, (out_h, out_w), mode='bilinear', align_corners=False)."""
    B, C, H, W = x.shape
    x = x.astype(jnp.float32)
    sy, sx = H / out_h, W / out_w
    ys = jnp.maximum((jnp.arange(out_h, dtype=jnp.float32) + 0.5) * sy - 0.5, 0.0)
    xs = jnp.maximum((jnp.arange(out_w, dtype=jnp.float32) + 0.5) * sx - 0.5, 0.0)
    y0 = jnp.floor(ys).astype(jnp.int32)
    x0 = jnp.floor(xs).astype(jnp.int32)
    y1 = jnp.minimum(y0 + 1, H - 1)
    x1 = jnp.minimum(x0 + 1, W - 1)
    wy = (ys - y0.astype(jnp.float32))[:, None]   # (out_h, 1)
    wx = (xs - x0.astype(jnp.float32))[None, :]   # (1, out_w)

    def gather(yi, xi):
        return jnp.take(jnp.take(x, yi, axis=2), xi, axis=3)

    top = gather(y0, x0) * (1.0 - wx) + gather(y0, x1) * wx
    bot = gather(y1, x0) * (1.0 - wx) + gather(y1, x1) * wx
    return top * (1.0 - wy) + bot * wy


def _pick_block_batch(B, N):
    """Largest divisor of B such that the double-buffered (N,N) output blocks
    stay within a ~16 MiB budget (safe on v7x's 64 MiB VMEM)."""
    per_sample = N * N * 4 * 2            # rqs block bytes, double-buffered
    cap = max(1, (16 << 20) // per_sample)
    bb = min(B, cap)
    while B % bb:
        bb -= 1
    return bb


def transformer_forward(x_sup, x_que, x_sup_gt):
    """Forward pass of Transformer.forward(x_sup, x_que, x_sup_gt).

    x_sup, x_que : (B, C, f, f) float32   (NCHW)
    x_sup_gt     : (B, 1, Hg, Wg) float32 (NCHW mask)
    returns (x_att (B,1,f,f), R_qs (B, f*f, f*f))
    """
    B, C, f, _ = x_sup.shape
    N = f * f

    # inverse_trans prep: resize GT mask to (f, f) and flatten  (glue)
    mask = bilinear_resize_nchw(x_sup_gt, f, f).reshape(B, 1, N)
    sup = x_sup.reshape(B, C, N).astype(jnp.float32)
    que = x_que.reshape(B, C, N).astype(jnp.float32)

    Bb = _pick_block_batch(B, N)

    rqs, att = pl.pallas_call(
        _transformer_kernel,
        out_shape=(
            jax.ShapeDtypeStruct((B, N, N), jnp.float32),
            jax.ShapeDtypeStruct((B, 1, N), jnp.float32),
        ),
        grid=(B // Bb,),
        in_specs=[
            pl.BlockSpec((Bb, C, N), lambda b: (b, 0, 0)),
            pl.BlockSpec((Bb, C, N), lambda b: (b, 0, 0)),
            pl.BlockSpec((Bb, 1, N), lambda b: (b, 0, 0)),
        ],
        out_specs=(
            pl.BlockSpec((Bb, N, N), lambda b: (b, 0, 0)),
            pl.BlockSpec((Bb, 1, N), lambda b: (b, 0, 0)),
        ),
        compiler_params=pltpu.CompilerParams(
            dimension_semantics=("parallel",),
            vmem_limit_bytes=32 * 1024 * 1024,
        ),
    )(sup, que, mask)

    x_att = att.reshape(B, 1, f, f)
    return x_att, rqs


# ----------------------------- pure-JAX reference ----------------------------

def _reference(x_sup, x_que, x_sup_gt):
    B, C, f, _ = x_sup.shape
    N = f * f
    m = bilinear_resize_nchw(x_sup_gt, f, f).reshape(B, 1, N)
    mt = jnp.transpose(m, (0, 2, 1))
    mul = jnp.matmul(m, mt) + 1e-5                     # (B,1,1)
    gene = mt / mul                                    # (B,N,1)
    sup = x_sup.reshape(B, C, N)
    que = x_que.reshape(B, C, N)
    qn = jnp.sqrt(jnp.sum(que * que, axis=1, keepdims=True))  # (B,1,N)
    sn = jnp.sqrt(jnp.sum(sup * sup, axis=1, keepdims=True))
    qs_norm = jnp.matmul(jnp.transpose(qn, (0, 2, 1)), sn)
    qs = jnp.matmul(jnp.transpose(que, (0, 2, 1)), sup)
    rqs = qs / (qs_norm + 1e-5)
    att = jnp.matmul(rqs, gene).reshape(B, 1, f, f)
    flat = att.reshape(B, 1, -1)
    amin = flat.min(axis=2)[:, :, None, None]
    amax = flat.max(axis=2)[:, :, None, None]
    att = (att - amin) / (amax - amin + 1e-5)
    return att, rqs


# ----------------------------------- main ------------------------------------

if __name__ == "__main__":
    B, C, f = 2, 4, 16
    key = jax.random.PRNGKey(0)
    k1, k2, k3 = jax.random.split(key, 3)
    x_sup = jax.random.normal(k1, (B, C, f, f), dtype=jnp.float32)
    x_que = jax.random.normal(k2, (B, C, f, f), dtype=jnp.float32)
    x_sup_gt = (jax.random.uniform(k3, (B, 1, f, f)) > 0.5).astype(jnp.float32)

    x_att, r_qs = transformer_forward(x_sup, x_que, x_sup_gt)
    jax.block_until_ready((x_att, r_qs))

    ref_att, ref_rqs = _reference(x_sup, x_que, x_sup_gt)
    np.testing.assert_allclose(np.asarray(r_qs), np.asarray(ref_rqs), rtol=1e-3, atol=1e-3)
    np.testing.assert_allclose(np.asarray(x_att), np.asarray(ref_att), rtol=1e-3, atol=1e-3)

    print("KERNEL_OK")
</pallas_src>

<mosaic_0001>
module attributes {stable_mosaic.version = 11 : i64} {
  func.func @_transformer_kernel(%arg0: i32, %arg1: memref<2x4x256xf32, #tpu.memory_space<vmem>>, %arg2: memref<2x4x256xf32, #tpu.memory_space<vmem>>, %arg3: memref<2x1x256xf32, #tpu.memory_space<vmem>>, %arg4: memref<2x256x256xf32, #tpu.memory_space<vmem>>, %arg5: memref<2x1x256xf32, #tpu.memory_space<vmem>>) attributes {dimension_semantics = [#tpu.dimension_semantics<parallel>], iteration_bounds = array<i64: 1>, scalar_prefetch = 0 : i64, scratch_operands = 0 : i64, tpu.core_type = #tpu.core_type<tc>, window_params = [{transform_indices = @transform_0, window_bounds = array<i64: 2, 4, 256>}, {transform_indices = @transform_1, window_bounds = array<i64: 2, 4, 256>}, {transform_indices = @transform_2, window_bounds = array<i64: 2, 1, 256>}, {transform_indices = @transform_3, window_bounds = array<i64: 2, 256, 256>}, {transform_indices = @transform_4, window_bounds = array<i64: 2, 1, 256>}]} {
    %c0 = arith.constant 0 : index
    %c0_0 = arith.constant 0 : index
    %c0_1 = arith.constant 0 : index
    %0 = vector.load %arg1[%c0, %c0_0, %c0_1] : memref<2x4x256xf32, #tpu.memory_space<vmem>>, vector<1x4x256xf32>
    %1 = vector.shape_cast %0 : vector<1x4x256xf32> to vector<4x256xf32>
    %c0_2 = arith.constant 0 : index
    %c0_3 = arith.constant 0 : index
    %c0_4 = arith.constant 0 : index
    %2 = vector.load %arg2[%c0_2, %c0_3, %c0_4] : memref<2x4x256xf32, #tpu.memory_space<vmem>>, vector<1x4x256xf32>
    %3 = vector.shape_cast %2 : vector<1x4x256xf32> to vector<4x256xf32>
    %c0_5 = arith.constant 0 : index
    %c0_6 = arith.constant 0 : index
    %c0_7 = arith.constant 0 : index
    %4 = vector.load %arg3[%c0_5, %c0_6, %c0_7] : memref<2x1x256xf32, #tpu.memory_space<vmem>>, vector<1x1x256xf32>
    %5 = vector.shape_cast %4 : vector<1x1x256xf32> to vector<1x256xf32>
    %6 = arith.mulf %3, %3 : vector<4x256xf32>
    %cst = arith.constant dense<0.000000e+00> : vector<256xf32>
    %7 = vector.multi_reduction <add>, %6, %cst [0] : vector<4x256xf32> to vector<256xf32>
    %8 = vector.shape_cast %7 : vector<256xf32> to vector<1x256xf32>
    %cst_8 = arith.constant 9.99999996E-13 : f32
    %9 = vector.broadcast %cst_8 : f32 to vector<1x256xf32>
    %10 = arith.addf %8, %9 : vector<1x256xf32>
    %11 = math.rsqrt %10 : vector<1x256xf32>
    %12 = arith.mulf %1, %1 : vector<4x256xf32>
    %cst_9 = arith.constant dense<0.000000e+00> : vector<256xf32>
    %13 = vector.multi_reduction <add>, %12, %cst_9 [0] : vector<4x256xf32> to vector<256xf32>
    %14 = vector.shape_cast %13 : vector<256xf32> to vector<1x256xf32>
    %cst_10 = arith.constant 9.99999996E-13 : f32
    %15 = vector.broadcast %cst_10 : f32 to vector<1x256xf32>
    %16 = arith.addf %14, %15 : vector<1x256xf32>
    %17 = math.rsqrt %16 : vector<1x256xf32>
    %18 = vector.broadcast %11 : vector<1x256xf32> to vector<4x256xf32>
    %19 = arith.mulf %3, %18 : vector<4x256xf32>
    %cst_11 = arith.constant dense<0.000000e+00> : vector<256x256xf32>
    %20 = tpu.matmul %19, %1, %cst_11 {dimension_numbers = #tpu.dot_dimension_numbers<[0], [0], [1], [1], [0, 1, 1, 1], [], []>} : vector<4x256xf32>, vector<4x256xf32>, vector<256x256xf32> -> vector<256x256xf32>
    %21 = vector.broadcast %17 : vector<1x256xf32> to vector<256x256xf32>
    %22 = arith.mulf %20, %21 : vector<256x256xf32>
    %c0_12 = arith.constant 0 : index
    %c0_13 = arith.constant 0 : index
    %c0_14 = arith.constant 0 : index
    %23 = vector.load %arg4[%c0_12, %c0_13, %c0_14] : memref<2x256x256xf32, #tpu.memory_space<vmem>>, vector<1x256x256xf32>
    %24 = vector.shape_cast %23 : vector<1x256x256xf32> to vector<256x256xf32>
    %25 = vector.shape_cast %22 : vector<256x256xf32> to vector<1x256x256xf32>
    tpu.vector_store %arg4[%c0_12, %c0_13, %c0_14], %25 {strides = array<i32>} : memref<2x256x256xf32, #tpu.memory_space<vmem>>, vector<1x256x256xf32>,
    %26 = arith.mulf %5, %5 : vector<1x256xf32>
    %27 = vector.shape_cast %26 : vector<1x256xf32> to vector<1x1x256xf32>
    %cst_15 = arith.constant dense<0.000000e+00> : vector<1xf32>
    %28 = vector.multi_reduction <add>, %27, %cst_15 [1, 2] : vector<1x1x256xf32> to vector<1xf32>
    %29 = vector.shape_cast %28 : vector<1xf32> to vector<1x1x1xf32>
    %30 = vector.extract %29[0, 0, 0] : f32 from vector<1x1x1xf32>
    %cst_16 = arith.constant 9.99999974E-6 : f32
    %31 = arith.addf %30, %cst_16 : f32
    %32 = arith.mulf %17, %5 : vector<1x256xf32>
    %33 = vector.broadcast %32 : vector<1x256xf32> to vector<4x256xf32>
    %34 = arith.mulf %1, %33 : vector<4x256xf32>
    %cst_17 = arith.constant dense<0.000000e+00> : vector<4xf32>
    %35 = vector.multi_reduction <add>, %34, %cst_17 [1] : vector<4x256xf32> to vector<4xf32>
    %36 = vector.shape_cast %35 : vector<4xf32> to vector<4x1xf32>
    %37 = vector.broadcast %36 : vector<4x1xf32> to vector<4x256xf32>
    %38 = arith.mulf %19, %37 : vector<4x256xf32>
    %cst_18 = arith.constant dense<0.000000e+00> : vector<256xf32>
    %39 = vector.multi_reduction <add>, %38, %cst_18 [0] : vector<4x256xf32> to vector<256xf32>
    %40 = vector.shape_cast %39 : vector<256xf32> to vector<1x256xf32>
    %41 = vector.broadcast %31 : f32 to vector<1x256xf32>
    %42 = arith.divf %40, %41 : vector<1x256xf32>
    %43 = vector.shape_cast %42 : vector<1x256xf32> to vector<1x1x256xf32>
    %cst_19 = arith.constant dense<0x7F800000> : vector<1xf32>
    %44 = vector.multi_reduction <minimumf>, %43, %cst_19 [1, 2] : vector<1x1x256xf32> to vector<1xf32>
    %45 = vector.shape_cast %44 : vector<1xf32> to vector<1x1x1xf32>
    %46 = vector.extract %45[0, 0, 0] : f32 from vector<1x1x1xf32>
    %47 = vector.shape_cast %42 : vector<1x256xf32> to vector<1x1x256xf32>
    %cst_20 = arith.constant dense<0xFF800000> : vector<1xf32>
    %48 = vector.multi_reduction <maximumf>, %47, %cst_20 [1, 2] : vector<1x1x256xf32> to vector<1xf32>
    %49 = vector.shape_cast %48 : vector<1xf32> to vector<1x1x1xf32>
    %50 = vector.extract %49[0, 0, 0] : f32 from vector<1x1x1xf32>
    %51 = vector.broadcast %46 : f32 to vector<1x256xf32>
    %52 = arith.subf %42, %51 : vector<1x256xf32>
    %53 = arith.subf %50, %46 : f32
    %cst_21 = arith.constant 9.99999974E-6 : f32
    %54 = arith.addf %53, %cst_21 : f32
    %55 = vector.broadcast %54 : f32 to vector<1x256xf32>
    %56 = arith.divf %52, %55 : vector<1x256xf32>
    %c0_22 = arith.constant 0 : index
    %c0_23 = arith.constant 0 : index
    %c0_24 = arith.constant 0 : index
    %57 = vector.load %arg5[%c0_22, %c0_23, %c0_24] : memref<2x1x256xf32, #tpu.memory_space<vmem>>, vector<1x1x256xf32>
    %58 = vector.shape_cast %57 : vector<1x1x256xf32> to vector<1x256xf32>
    %59 = vector.shape_cast %56 : vector<1x256xf32> to vector<1x1x256xf32>
    tpu.vector_store %arg5[%c0_22, %c0_23, %c0_24], %59 {strides = array<i32>} : memref<2x1x256xf32, #tpu.memory_space<vmem>>, vector<1x1x256xf32>,
    %c1 = arith.constant 1 : index
    %c0_25 = arith.constant 0 : index
    %c0_26 = arith.constant 0 : index
    %60 = vector.load %arg1[%c1, %c0_25, %c0_26] : memref<2x4x256xf32, #tpu.memory_space<vmem>>, vector<1x4x256xf32>
    %61 = vector.shape_cast %60 : vector<1x4x256xf32> to vector<4x256xf32>
    %c1_27 = arith.constant 1 : index
    %c0_28 = arith.constant 0 : index
    %c0_29 = arith.constant 0 : index
    %62 = vector.load %arg2[%c1_27, %c0_28, %c0_29] : memref<2x4x256xf32, #tpu.memory_space<vmem>>, vector<1x4x256xf32>
    %63 = vector.shape_cast %62 : vector<1x4x256xf32> to vector<4x256xf32>
    %c1_30 = arith.constant 1 : index
    %c0_31 = arith.constant 0 : index
    %c0_32 = arith.constant 0 : index
    %64 = vector.load %arg3[%c1_30, %c0_31, %c0_32] : memref<2x1x256xf32, #tpu.memory_space<vmem>>, vector<1x1x256xf32>
    %65 = vector.shape_cast %64 : vector<1x1x256xf32> to vector<1x256xf32>
    %66 = arith.mulf %63, %63 : vector<4x256xf32>
    %cst_33 = arith.constant dense<0.000000e+00> : vector<256xf32>
    %67 = vector.multi_reduction <add>, %66, %cst_33 [0] : vector<4x256xf32> to vector<256xf32>
    %68 = vector.shape_cast %67 : vector<256xf32> to vector<1x256xf32>
    %cst_34 = arith.constant 9.99999996E-13 : f32
    %69 = vector.broadcast %cst_34 : f32 to vector<1x256xf32>
    %70 = arith.addf %68, %69 : vector<1x256xf32>
    %71 = math.rsqrt %70 : vector<1x256xf32>
    %72 = arith.mulf %61, %61 : vector<4x256xf32>
    %cst_35 = arith.constant dense<0.000000e+00> : vector<256xf32>
    %73 = vector.multi_reduction <add>, %72, %cst_35 [0] : vector<4x256xf32> to vector<256xf32>
    %74 = vector.shape_cast %73 : vector<256xf32> to vector<1x256xf32>
    %cst_36 = arith.constant 9.99999996E-13 : f32
    %75 = vector.broadcast %cst_36 : f32 to vector<1x256xf32>
    %76 = arith.addf %74, %75 : vector<1x256xf32>
    %77 = math.rsqrt %76 : vector<1x256xf32>
    %78 = vector.broadcast %71 : vector<1x256xf32> to vector<4x256xf32>
    %79 = arith.mulf %63, %78 : vector<4x256xf32>
    %cst_37 = arith.constant dense<0.000000e+00> : vector<256x256xf32>
    %80 = tpu.matmul %79, %61, %cst_37 {dimension_numbers = #tpu.dot_dimension_numbers<[0], [0], [1], [1], [0, 1, 1, 1], [], []>} : vector<4x256xf32>, vector<4x256xf32>, vector<256x256xf32> -> vector<256x256xf32>
    %81 = vector.broadcast %77 : vector<1x256xf32> to vector<256x256xf32>
    %82 = arith.mulf %80, %81 : vector<256x256xf32>
    %c1_38 = arith.constant 1 : index
    %c0_39 = arith.constant 0 : index
    %c0_40 = arith.constant 0 : index
    %83 = vector.load %arg4[%c1_38, %c0_39, %c0_40] : memref<2x256x256xf32, #tpu.memory_space<vmem>>, vector<1x256x256xf32>
    %84 = vector.shape_cast %83 : vector<1x256x256xf32> to vector<256x256xf32>
    %85 = vector.shape_cast %82 : vector<256x256xf32> to vector<1x256x256xf32>
    tpu.vector_store %arg4[%c1_38, %c0_39, %c0_40], %85 {strides = array<i32>} : memref<2x256x256xf32, #tpu.memory_space<vmem>>, vector<1x256x256xf32>,
    %86 = arith.mulf %65, %65 : vector<1x256xf32>
    %87 = vector.shape_cast %86 : vector<1x256xf32> to vector<1x1x256xf32>
    %cst_41 = arith.constant dense<0.000000e+00> : vector<1xf32>
    %88 = vector.multi_reduction <add>, %87, %cst_41 [1, 2] : vector<1x1x256xf32> to vector<1xf32>
    %89 = vector.shape_cast %88 : vector<1xf32> to vector<1x1x1xf32>
    %90 = vector.extract %89[0, 0, 0] : f32 from vector<1x1x1xf32>
    %cst_42 = arith.constant 9.99999974E-6 : f32
    %91 = arith.addf %90, %cst_42 : f32
    %92 = arith.mulf %77, %65 : vector<1x256xf32>
    %93 = vector.broadcast %92 : vector<1x256xf32> to vector<4x256xf32>
    %94 = arith.mulf %61, %93 : vector<4x256xf32>
    %cst_43 = arith.constant dense<0.000000e+00> : vector<4xf32>
    %95 = vector.multi_reduction <add>, %94, %cst_43 [1] : vector<4x256xf32> to vector<4xf32>
    %96 = vector.shape_cast %95 : vector<4xf32> to vector<4x1xf32>
    %97 = vector.broadcast %96 : vector<4x1xf32> to vector<4x256xf32>
    %98 = arith.mulf %79, %97 : vector<4x256xf32>
    %cst_44 = arith.constant dense<0.000000e+00> : vector<256xf32>
    %99 = vector.multi_reduction <add>, %98, %cst_44 [0] : vector<4x256xf32> to vector<256xf32>
    %100 = vector.shape_cast %99 : vector<256xf32> to vector<1x256xf32>
    %101 = vector.broadcast %91 : f32 to vector<1x256xf32>
    %102 = arith.divf %100, %101 : vector<1x256xf32>
    %103 = vector.shape_cast %102 : vector<1x256xf32> to vector<1x1x256xf32>
    %cst_45 = arith.constant dense<0x7F800000> : vector<1xf32>
    %104 = vector.multi_reduction <minimumf>, %103, %cst_45 [1, 2] : vector<1x1x256xf32> to vector<1xf32>
    %105 = vector.shape_cast %104 : vector<1xf32> to vector<1x1x1xf32>
    %106 = vector.extract %105[0, 0, 0] : f32 from vector<1x1x1xf32>
    %107 = vector.shape_cast %102 : vector<1x256xf32> to vector<1x1x256xf32>
    %cst_46 = arith.constant dense<0xFF800000> : vector<1xf32>
    %108 = vector.multi_reduction <maximumf>, %107, %cst_46 [1, 2] : vector<1x1x256xf32> to vector<1xf32>
    %109 = vector.shape_cast %108 : vector<1xf32> to vector<1x1x1xf32>
    %110 = vector.extract %109[0, 0, 0] : f32 from vector<1x1x1xf32>
    %111 = vector.broadcast %106 : f32 to vector<1x256xf32>
    %112 = arith.subf %102, %111 : vector<1x256xf32>
    %113 = arith.subf %110, %106 : f32
    %cst_47 = arith.constant 9.99999974E-6 : f32
    %114 = arith.addf %113, %cst_47 : f32
    %115 = vector.broadcast %114 : f32 to vector<1x256xf32>
    %116 = arith.divf %112, %115 : vector<1x256xf32>
    %c1_48 = arith.constant 1 : index
    %c0_49 = arith.constant 0 : index
    %c0_50 = arith.constant 0 : index
    %117 = vector.load %arg5[%c1_48, %c0_49, %c0_50] : memref<2x1x256xf32, #tpu.memory_space<vmem>>, vector<1x1x256xf32>
    %118 = vector.shape_cast %117 : vector<1x1x256xf32> to vector<1x256xf32>
    %119 = vector.shape_cast %116 : vector<1x256xf32> to vector<1x1x256xf32>
    tpu.vector_store %arg5[%c1_48, %c0_49, %c0_50], %119 {strides = array<i32>} : memref<2x1x256xf32, #tpu.memory_space<vmem>>, vector<1x1x256xf32>,
    return
  }
  func.func @transform_0(%arg0: i32) -> (i32, i32, i32) {
    %c0_i32 = arith.constant 0 : i32
    %c0_i32_0 = arith.constant 0 : i32
    %c0_i32_1 = arith.constant 0 : i32
    return %arg0, %c0_i32, %c0_i32_0 : i32, i32, i32
  }
  func.func @transform_1(%arg0: i32) -> (i32, i32, i32) {
    %c0_i32 = arith.constant 0 : i32
    %c0_i32_0 = arith.constant 0 : i32
    %c0_i32_1 = arith.constant 0 : i32
    return %arg0, %c0_i32, %c0_i32_0 : i32, i32, i32
  }
  func.func @transform_2(%arg0: i32) -> (i32, i32, i32) {
    %c0_i32 = arith.constant 0 : i32
    %c0_i32_0 = arith.constant 0 : i32
    %c0_i32_1 = arith.constant 0 : i32
    return %arg0, %c0_i32, %c0_i32_0 : i32, i32, i32
  }
  func.func @transform_3(%arg0: i32) -> (i32, i32, i32) {
    %c0_i32 = arith.constant 0 : i32
    %c0_i32_0 = arith.constant 0 : i32
    %c0_i32_1 = arith.constant 0 : i32
    return %arg0, %c0_i32, %c0_i32_0 : i32, i32, i32
  }
  func.func @transform_4(%arg0: i32) -> (i32, i32, i32) {
    %c0_i32 = arith.constant 0 : i32
    %c0_i32_0 = arith.constant 0 : i32
    %c0_i32_1 = arith.constant 0 : i32
    return %arg0, %c0_i32, %c0_i32_0 : i32, i32, i32
  }
}

</mosaic_0001>

<llo_original>
// kernel: tpu_custom_call.1
$region0: #{tpu_custom_call.1}
  #allocation0 [shape = 'u32[]', space=smem, size = 0x4, offset = 0x4, fixed_abs, tag = 'smem constant byte address 0x4 - core index']
  #allocation1 [shape = 'u32[72,128]{1,0:T(1,128)}', space=vmem, size = 0x9000, scoped, tag = 'internal scratch']
  %s0 = inlined_call_operand.hbm [shape: f32[2,4,256], index: 0, kind: input, shape index: {}]
  %s1 = inlined_call_operand.hbm [shape: f32[2,4,256], index: 1, kind: input, shape index: {}]
  %s2 = inlined_call_operand.hbm [shape: f32[2,1,256], index: 2, kind: input, shape index: {}]
  %s3 = inlined_call_operand.hbm [shape: f32[2,256,256], index: 3, kind: output, shape index: {0}]
  %s4 = inlined_call_operand.hbm [shape: f32[2,1,256], index: 4, kind: output, shape index: {1}]
  %5 = xla_tuple %s3, %s4
  %s6 = sld [smem:[#allocation0]]
  $region42: #{tpu_custom_call.1} parent=0
    _
  %s8 = ssub.s32 1, %s6
  %s9 = scalar_select 0, %s8, %s6
  $region1: #{tpu_custom_call.1} parent=0
    #allocation2 [shape = 'u8[8192]{0}', space=vmem, size = 0x2000, scoped, tag = 'input window, operand 0, single buffered']
    #allocation3 [shape = 's32[1]{0}', space=sflag, size = 0x4, scoped, tag = 'scoped memory for tpu_custom_call.1']
    #allocation4 [shape = 's32[1]{0}', space=sflag, size = 0x4, scoped, tag = 'scoped memory for tpu_custom_call.1']
    #allocation5 [shape = 'u8[8192]{0}', space=vmem, size = 0x2000, scoped, tag = 'input window, operand 1, single buffered']
    #allocation6 [shape = 's32[1]{0}', space=sflag, size = 0x4, scoped, tag = 'scoped memory for tpu_custom_call.1']
    #allocation7 [shape = 'u8[2048]{0}', space=vmem, size = 0x800, scoped, tag = 'input window, operand 2, single buffered']
    #allocation8 [shape = 'u8[524288]{0}', space=vmem, size = 0x80000, scoped, tag = 'output window, operand 0, single buffered']
    #allocation9 [shape = 'u8[2048]{0}', space=vmem, size = 0x800, scoped, tag = 'output window, operand 1, single buffered']
    #allocation10 [shape = 's32[1]{0}', space=sflag, size = 0x4, scoped, tag = 'scoped memory for tpu_custom_call.1']
    %10 = vsyncpa [#allocation3], 0
    %11 = vsyncpa [#allocation6], 0
    %12 = vsyncpa [#allocation4], 0
    %13 = vsyncpa [#allocation10], 0
    // Predicated region
    $region2: #{tpu_custom_call.1} parent=1 // pred_check
      _
    $region3: #{tpu_custom_call.1} parent=1 // pred_check_branch
      %15 = sbr.rel (0) target = $region5
    $region4: #{tpu_custom_call.1} parent=1 // pred_region
      %17 = vsyncadd [#allocation3], 0
      %s18 = sshll.u32 %s0, 4
      %s19 = int_to_ptr.hbm [resolvable:$true] %s18
      %s20 = sshll.u32 [#allocation2], 4
      %s21 = int_to_ptr.vmem [resolvable:$true] %s20
      %26 = dma.hbm_to_vmem [thread:$0]  %s19, 256, %s21, [#allocation3], 128, 128, 8
    $region5: #{tpu_custom_call.1} parent=1 // pred_fallthru
      _
    // Predicated region
    $region6: #{tpu_custom_call.1} parent=1 // pred_check
      _
    $region7: #{tpu_custom_call.1} parent=1 // pred_check_branch
      %28 = sbr.rel (0) target = $region9
    $region8: #{tpu_custom_call.1} parent=1 // pred_region
      %30 = vsyncadd [#allocation6], 0
      %s31 = sshll.u32 %s1, 4
      %s32 = int_to_ptr.hbm [resolvable:$true] %s31
      %s33 = sshll.u32 [#allocation5], 4
      %s34 = int_to_ptr.vmem [resolvable:$true] %s33
      %39 = dma.hbm_to_vmem [thread:$0]  %s32, 256, %s34, [#allocation6], 128, 128, 8
    $region9: #{tpu_custom_call.1} parent=1 // pred_fallthru
      _
    // Predicated region
    $region10: #{tpu_custom_call.1} parent=1 // pred_check
      _
    $region11: #{tpu_custom_call.1} parent=1 // pred_check_branch
      %41 = sbr.rel (0) target = $region13
    $region12: #{tpu_custom_call.1} parent=1 // pred_region
      %43 = vsyncadd [#allocation6], 0
      %s44 = sshll.u32 %s2, 4
      %s45 = int_to_ptr.hbm [resolvable:$true] %s44
      %s46 = sshll.u32 [#allocation7], 4
      %s47 = int_to_ptr.vmem [resolvable:$true] %s46
      %52 = dma.hbm_to_vmem [thread:$0]  %s45, 64, %s47, [#allocation6], 32, 32, 2
    $region13: #{tpu_custom_call.1} parent=1 // pred_fallthru
      _
    // Predicated region
    $region14: #{tpu_custom_call.1} parent=1 // pred_check
      _
    $region15: #{tpu_custom_call.1} parent=1 // pred_check_branch
      %54 = sbr.rel (0) target = $region17
    $region16: #{tpu_custom_call.1} parent=1 // pred_region
      %56 = dma.done [#allocation3], 256
    $region17: #{tpu_custom_call.1} parent=1 // pred_fallthru
      _
    // Predicated region
    $region18: #{tpu_custom_call.1} parent=1 // pred_check
      _
    $region19: #{tpu_custom_call.1} parent=1 // pred_check_branch
      %58 = sbr.rel (0) target = $region21
    $region20: #{tpu_custom_call.1} parent=1 // pred_region
      %60 = dma.done [#allocation6], 256
    $region21: #{tpu_custom_call.1} parent=1 // pred_fallthru
      _
    // Predicated region
    $region22: #{tpu_custom_call.1} parent=1 // pred_check
      _
    $region23: #{tpu_custom_call.1} parent=1 // pred_check_branch
      %62 = sbr.rel (0) target = $region25
    $region24: #{tpu_custom_call.1} parent=1 // pred_region
      %64 = dma.done [#allocation6], 64
    $region25: #{tpu_custom_call.1} parent=1 // pred_fallthru
      _
    %v65 = vld [vmem:[#allocation2] sm:$0xff]
    %v66 = vld [vmem:[#allocation5] sm:$0xff]
    %v67 = vld [vmem:[#allocation7] sm:$0x3]
    %v68 = vmul.f32 %v66, %v66
    %70 = vst [vmem:[#allocation1] ss:$2 sm:$0xff] %v68
    %v71 = vld.sshfl [vmem:[#allocation1] sm:$0xff pattern:$0x75316420]
    %v72 = vld.sshfl [vmem:[#allocation1 + $0x8] sm:$0xff pattern:$0x75316420]
    %vm75 = vcmask 1043456
    %v76 = vsel %vm75, %v71, 0.0
    %v77 = vrot.slane %v76, 4
    %v78 = vadd.f32 %v76, %v77
    %v79 = vrot.slane %v78, 2
    %v80 = vadd.f32 %v78, %v79
    %v81 = vrot.slane %v80, 1
    %v82 = vadd.f32 %v80, %v81
    %v83 = vsel %vm75, %v72, 0.0
    %v84 = vrot.slane %v83, 4
    %v85 = vadd.f32 %v83, %v84
    %v86 = vrot.slane %v85, 2
    %v87 = vadd.f32 %v85, %v86
    %v88 = vrot.slane %v87, 1
    %v89 = vadd.f32 %v87, %v88
    %v90 = vadd.f32 %v82, 1e-12
    %v91 = vadd.f32 %v89, 1e-12
    %v92 = vrsqrt.pop %v90
    %v93 = vmul.f32 %v92, %v90
    %v94 = vmul.f32 %v93, %v92
    %v95 = vmul.f32 0.5, %v94
    %v96 = vsub.f32 1.5, %v95
    %v97 = vmul.f32 %v92, %v96
    %vm98 = vweird.f32 %v90
    %vm99 = vweird.f32 %v92
    %vm100 = vmor %vm98, %vm99
    %v101 = vsel %vm100, %v92, %v97
    %v102 = vrsqrt.pop %v91
    %v103 = vmul.f32 %v102, %v91
    %v104 = vmul.f32 %v103, %v102
    %v105 = vmul.f32 0.5, %v104
    %v106 = vsub.f32 1.5, %v105
    %v107 = vmul.f32 %v102, %v106
    %vm108 = vweird.f32 %v91
    %vm109 = vweird.f32 %v102
    %vm110 = vmor %vm108, %vm109
    %v111 = vsel %vm110, %v102, %v107
    %v112 = vmul.f32 %v65, %v65
    %114 = vst [vmem:[#allocation1] ss:$2 sm:$0xff] %v112
    %v115 = vld.sshfl [vmem:[#allocation1] sm:$0xff pattern:$0x75316420]
    %v116 = vld.sshfl [vmem:[#allocation1 + $0x8] sm:$0xff pattern:$0x75316420]
    %v119 = vsel %vm75, %v115, 0.0
    %v120 = vrot.slane %v119, 4
    %v121 = vadd.f32 %v119, %v120
    %v122 = vrot.slane %v121, 2
    %v123 = vadd.f32 %v121, %v122
    %v124 = vrot.slane %v123, 1
    %v125 = vadd.f32 %v123, %v124
    %v126 = vsel %vm75, %v116, 0.0
    %v127 = vrot.slane %v126, 4
    %v128 = vadd.f32 %v126, %v127
    %v129 = vrot.slane %v128, 2
    %v130 = vadd.f32 %v128, %v129
    %v131 = vrot.slane %v130, 1
    %v132 = vadd.f32 %v130, %v131
    %v133 = vadd.f32 %v125, 1e-12
    %v134 = vadd.f32 %v132, 1e-12
    %v135 = vrsqrt.pop %v133
    %v136 = vmul.f32 %v135, %v133
    %v137 = vmul.f32 %v136, %v135
    %v138 = vmul.f32 0.5, %v137
    %v139 = vsub.f32 1.5, %v138
    %v140 = vmul.f32 %v135, %v139
    %vm141 = vweird.f32 %v133
    %vm142 = vweird.f32 %v135
    %vm143 = vmor %vm141, %vm142
    %v144 = vsel %vm143, %v135, %v140
    %v145 = vrsqrt.pop %v134
    %v146 = vmul.f32 %v145, %v134
    %v147 = vmul.f32 %v146, %v145
    %v148 = vmul.f32 0.5, %v147
    %v149 = vsub.f32 1.5, %v148
    %v150 = vmul.f32 %v145, %v149
    %vm151 = vweird.f32 %v134
    %vm152 = vweird.f32 %v145
    %vm153 = vmor %vm151, %vm152
    %v154 = vsel %vm153, %v145, %v150
    %v157 = vrot.slane %v111, 4
    %v158 = vsel %vm75, %v101, %v157
    %v160 = vmul.f32 %v66, %v158
    %162 = vst [vmem:[#allocation1] ss:$2 sm:$0xff] %v160
    %v163 = vld.sshfl [vmem:[#allocation1] sm:$0xff pattern:$0x75316420]
    %v164 = vld.sshfl [vmem:[#allocation1 + $0x8] sm:$0xff pattern:$0x75316420]
    %167 = vxpose.xlu0.b32.start [1/16] %v163, 128
    %168 = vxpose.xlu0.b32.cont [2/16] 0.0, 128
    %169 = vxpose.xlu0.b32.cont [3/16] 0.0, 128
    %170 = vxpose.xlu0.b32.cont [4/16] 0.0, 128
    %171 = vxpose.xlu0.b32.cont [5/16] 0.0, 128
    %172 = vxpose.xlu0.b32.cont [6/16] 0.0, 128
    %173 = vxpose.xlu0.b32.cont [7/16] 0.0, 128
    %174 = vxpose.xlu0.b32.cont [8/16] 0.0, 128
    %175 = vxpose.xlu0.b32.cont [9/16] 0.0, 128
    %176 = vxpose.xlu0.b32.cont [10/16] 0.0, 128
    %177 = vxpose.xlu0.b32.cont [11/16] 0.0, 128
    %178 = vxpose.xlu0.b32.cont [12/16] 0.0, 128
    %179 = vxpose.xlu0.b32.cont [13/16] 0.0, 128
    %180 = vxpose.xlu0.b32.cont [14/16] 0.0, 128
    %181 = vxpose.xlu0.b32.cont [15/16] 0.0, 128
    %182 = vxpose.xlu0.b32.end [16/16] 0.0, 128
    %v183 = vpop.trf.xlu0
    %v184 = vpop.trf.xlu0
    %v185 = vpop.trf.xlu0
    %v186 = vpop.trf.xlu0
    %v187 = vpop.trf.xlu0
    %v188 = vpop.trf.xlu0
    %v189 = vpop.trf.xlu0
    %v190 = vpop.trf.xlu0
    %v191 = vpop.trf.xlu0
    %v192 = vpop.trf.xlu0
    %v193 = vpop.trf.xlu0
    %v194 = vpop.trf.xlu0
    %v195 = vpop.trf.xlu0
    %v196 = vpop.trf.xlu0
    %v197 = vpop.trf.xlu0
    %v198 = vpop.trf.xlu0
    %199 = vxpose.xlu0.b32.start [1/16] %v164, 128
    %200 = vxpose.xlu0.b32.cont [2/16] 0.0, 128
    %201 = vxpose.xlu0.b32.cont [3/16] 0.0, 128
    %202 = vxpose.xlu0.b32.cont [4/16] 0.0, 128
    %203 = vxpose.xlu0.b32.cont [5/16] 0.0, 128
    %204 = vxpose.xlu0.b32.cont [6/16] 0.0, 128
    %205 = vxpose.xlu0.b32.cont [7/16] 0.0, 128
    %206 = vxpose.xlu0.b32.cont [8/16] 0.0, 128
    %207 = vxpose.xlu0.b32.cont [9/16] 0.0, 128
    %208 = vxpose.xlu0.b32.cont [10/16] 0.0, 128
    %209 = vxpose.xlu0.b32.cont [11/16] 0.0, 128
    %210 = vxpose.xlu0.b32.cont [12/16] 0.0, 128
    %211 = vxpose.xlu0.b32.cont [13/16] 0.0, 128
    %212 = vxpose.xlu0.b32.cont [14/16] 0.0, 128
    %213 = vxpose.xlu0.b32.cont [15/16] 0.0, 128
    %214 = vxpose.xlu0.b32.end [16/16] 0.0, 128
    %v215 = vpop.trf.xlu0
    %v216 = vpop.trf.xlu0
    %v217 = vpop.trf.xlu0
    %v218 = vpop.trf.xlu0
    %v219 = vpop.trf.xlu0
    %v220 = vpop.trf.xlu0
    %v221 = vpop.trf.xlu0
    %v222 = vpop.trf.xlu0
    %v223 = vpop.trf.xlu0
    %v224 = vpop.trf.xlu0
    %v225 = vpop.trf.xlu0
    %v226 = vpop.trf.xlu0
    %v227 = vpop.trf.xlu0
    %v228 = vpop.trf.xlu0
    %v229 = vpop.trf.xlu0
    %v230 = vpop.trf.xlu0
    %232 = vst [vmem:[#allocation1] ss:$2 sm:$0xff] %v65
    %v233 = vld.sshfl [vmem:[#allocation1] sm:$0xff pattern:$0x75316420]
    %v234 = vld.sshfl [vmem:[#allocation1 + $0x8] sm:$0xff pattern:$0x75316420]
    %vm235 = vcmask 31744
    %v237 = vsel %vm235, %v183, 0
    %v240 = vsel %vm235, %v184, 0
    %v243 = vsel %vm235, %v185, 0
    %v246 = vsel %vm235, %v186, 0
    %v249 = vsel %vm235, %v187, 0
    %v252 = vsel %vm235, %v188, 0
    %v255 = vsel %vm235, %v189, 0
    %v258 = vsel %vm235, %v190, 0
    %v261 = vsel %vm235, %v191, 0
    %v264 = vsel %vm235, %v192, 0
    %v267 = vsel %vm235, %v193, 0
    %v270 = vsel %vm235, %v194, 0
    %v273 = vsel %vm235, %v195, 0
    %v276 = vsel %vm235, %v196, 0
    %v279 = vsel %vm235, %v197, 0
    %v282 = vsel %vm235, %v198, 0
    %v285 = vsel %vm235, %v215, 0
    %v288 = vsel %vm235, %v216, 0
    %v291 = vsel %vm235, %v217, 0
    %v294 = vsel %vm235, %v218, 0
    %v297 = vsel %vm235, %v219, 0
    %v300 = vsel %vm235, %v220, 0
    %v303 = vsel %vm235, %v221, 0
    %v306 = vsel %vm235, %v222, 0
    %v309 = vsel %vm235, %v223, 0
    %v312 = vsel %vm235, %v224, 0
    %v315 = vsel %vm235, %v225, 0
    %v318 = vsel %vm235, %v226, 0
    %v321 = vsel %vm235, %v227, 0
    %v324 = vsel %vm235, %v228, 0
    %v327 = vsel %vm235, %v229, 0
    %v330 = vsel %vm235, %v230, 0
    %v332 = vsel %vm75, %v233, 0
    %v334 = vsel %vm75, %v234, 0
    %336 = vmatpush.msra.mxu0 0.0
    %337 = vmatpush.msra.mxu0 0.0
    %338 = vmatpush.msra.mxu0 0.0
    %339 = vmatpush.msra.mxu0 0.0
    %340 = vmatpush.msra.mxu0 0.0
    %341 = vmatpush.msra.mxu0 0.0
    %342 = vmatpush.msra.mxu0 0.0
    %343 = vmatpush.msra.mxu0 0.0
    %344 = vmatpush.msra.mxu0 0.0
    %345 = vmatpush.msra.mxu0 0.0
    %346 = vmatpush.msra.mxu0 0.0
    %347 = vmatpush.msra.mxu0 0.0
    %348 = vmatpush.msra.mxu0 0.0
    %349 = vmatpush.msra.mxu0 0.0
    %350 = vmatpush.msra.mxu0 0.0
    %351 = vmatpush.msra.mxu0 %v332
    %352 = vmatmul.f32.gmra.mxu0 %v237
    %v353 = vpop.f32.mrf.mxu0
    %v354 = vadd.f32 0.0, %v353
    %355 = vmatmul.f32.gmra.mxu0 %v240
    %v356 = vpop.f32.mrf.mxu0
    %v357 = vadd.f32 0.0, %v356
    %358 = vmatmul.f32.gmra.mxu0 %v243
    %v359 = vpop.f32.mrf.mxu0
    %v360 = vadd.f32 0.0, %v359
    %361 = vmatmul.f32.gmra.mxu0 %v246
    %v362 = vpop.f32.mrf.mxu0
    %v363 = vadd.f32 0.0, %v362
    %364 = vmatmul.f32.gmra.mxu0 %v249
    %v365 = vpop.f32.mrf.mxu0
    %v366 = vadd.f32 0.0, %v365
    %367 = vmatmul.f32.gmra.mxu0 %v252
    %v368 = vpop.f32.mrf.mxu0
    %v369 = vadd.f32 0.0, %v368
    %370 = vmatmul.f32.gmra.mxu0 %v255
    %v371 = vpop.f32.mrf.mxu0
    %v372 = vadd.f32 0.0, %v371
    %373 = vmatmul.f32.gmra.mxu0 %v258
    %v374 = vpop.f32.mrf.mxu0
    %v375 = vadd.f32 0.0, %v374
    %376 = vmatmul.f32.gmra.mxu0 %v261
    %v377 = vpop.f32.mrf.mxu0
    %v378 = vadd.f32 0.0, %v377
    %379 = vmatmul.f32.gmra.mxu0 %v264
    %v380 = vpop.f32.mrf.mxu0
    %v381 = vadd.f32 0.0, %v380
    %382 = vmatmul.f32.gmra.mxu0 %v267
    %v383 = vpop.f32.mrf.mxu0
    %v384 = vadd.f32 0.0, %v383
    %385 = vmatmul.f32.gmra.mxu0 %v270
    %v386 = vpop.f32.mrf.mxu0
    %v387 = vadd.f32 0.0, %v386
    %388 = vmatmul.f32.gmra.mxu0 %v273
    %v389 = vpop.f32.mrf.mxu0
    %v390 = vadd.f32 0.0, %v389
    %391 = vmatmul.f32.gmra.mxu0 %v276
    %v392 = vpop.f32.mrf.mxu0
    %v393 = vadd.f32 0.0, %v392
    %394 = vmatmul.f32.gmra.mxu0 %v279
    %v395 = vpop.f32.mrf.mxu0
    %v396 = vadd.f32 0.0, %v395
    %397 = vmatmul.f32.gmra.mxu0 %v282
    %v398 = vpop.f32.mrf.mxu0
    %v399 = vadd.f32 0.0, %v398
    %400 = vmatmul.f32.gmra.mxu0 %v285
    %v401 = vpop.f32.mrf.mxu0
    %v402 = vadd.f32 0.0, %v401
    %403 = vmatmul.f32.gmra.mxu0 %v288
    %v404 = vpop.f32.mrf.mxu0
    %v405 = vadd.f32 0.0, %v404
    %406 = vmatmul.f32.gmra.mxu0 %v291
    %v407 = vpop.f32.mrf.mxu0
    %v408 = vadd.f32 0.0, %v407
    %409 = vmatmul.f32.gmra.mxu0 %v294
    %v410 = vpop.f32.mrf.mxu0
    %v411 = vadd.f32 0.0, %v410
    %412 = vmatmul.f32.gmra.mxu0 %v297
    %v413 = vpop.f32.mrf.mxu0
    %v414 = vadd.f32 0.0, %v413
    %415 = vmatmul.f32.gmra.mxu0 %v300
    %v416 = vpop.f32.mrf.mxu0
    %v417 = vadd.f32 0.0, %v416
    %418 = vmatmul.f32.gmra.mxu0 %v303
    %v419 = vpop.f32.mrf.mxu0
    %v420 = vadd.f32 0.0, %v419
    %421 = vmatmul.f32.gmra.mxu0 %v306
    %v422 = vpop.f32.mrf.mxu0
    %v423 = vadd.f32 0.0, %v422
    %424 = vmatmul.f32.gmra.mxu0 %v309
    %v425 = vpop.f32.mrf.mxu0
    %v426 = vadd.f32 0.0, %v425
    %427 = vmatmul.f32.gmra.mxu0 %v312
    %v428 = vpop.f32.mrf.mxu0
    %v429 = vadd.f32 0.0, %v428
    %430 = vmatmul.f32.gmra.mxu0 %v315
    %v431 = vpop.f32.mrf.mxu0
    %v432 = vadd.f32 0.0, %v431
    %433 = vmatmul.f32.gmra.mxu0 %v318
    %v434 = vpop.f32.mrf.mxu0
    %v435 = vadd.f32 0.0, %v434
    %436 = vmatmul.f32.gmra.mxu0 %v321
    %v437 = vpop.f32.mrf.mxu0
    %v438 = vadd.f32 0.0, %v437
    %439 = vmatmul.f32.gmra.mxu0 %v324
    %v440 = vpop.f32.mrf.mxu0
    %v441 = vadd.f32 0.0, %v440
    %442 = vmatmul.f32.gmra.mxu0 %v327
    %v443 = vpop.f32.mrf.mxu0
    %v444 = vadd.f32 0.0, %v443
    %445 = vmatmul.f32.gmra.mxu0 %v330
    %v446 = vpop.f32.mrf.mxu0
    %v447 = vadd.f32 0.0, %v446
    %448 = vdwg.mxu0
    %449 = vmatpush.msra.mxu0 0.0
    %450 = vmatpush.msra.mxu0 0.0
    %451 = vmatpush.msra.mxu0 0.0
    %452 = vmatpush.msra.mxu0 0.0
    %453 = vmatpush.msra.mxu0 0.0
    %454 = vmatpush.msra.mxu0 0.0
    %455 = vmatpush.msra.mxu0 0.0
    %456 = vmatpush.msra.mxu0 0.0
    %457 = vmatpush.msra.mxu0 0.0
    %458 = vmatpush.msra.mxu0 0.0
    %459 = vmatpush.msra.mxu0 0.0
    %460 = vmatpush.msra.mxu0 0.0
    %461 = vmatpush.msra.mxu0 0.0
    %462 = vmatpush.msra.mxu0 0.0
    %463 = vmatpush.msra.mxu0 0.0
    %464 = vmatpush.msra.mxu0 %v334
    %465 = vmatmul.f32.gmra.mxu0 %v237
    %v466 = vpop.f32.mrf.mxu0
    %v467 = vadd.f32 0.0, %v466
    %468 = vmatmul.f32.gmra.mxu0 %v240
    %v469 = vpop.f32.mrf.mxu0
    %v470 = vadd.f32 0.0, %v469
    %471 = vmatmul.f32.gmra.mxu0 %v243
    %v472 = vpop.f32.mrf.mxu0
    %v473 = vadd.f32 0.0, %v472
    %474 = vmatmul.f32.gmra.mxu0 %v246
    %v475 = vpop.f32.mrf.mxu0
    %v476 = vadd.f32 0.0, %v475
    %477 = vmatmul.f32.gmra.mxu0 %v249
    %v478 = vpop.f32.mrf.mxu0
    %v479 = vadd.f32 0.0, %v478
    %480 = vmatmul.f32.gmra.mxu0 %v252
    %v481 = vpop.f32.mrf.mxu0
    %v482 = vadd.f32 0.0, %v481
    %483 = vmatmul.f32.gmra.mxu0 %v255
    %v484 = vpop.f32.mrf.mxu0
    %v485 = vadd.f32 0.0, %v484
    %486 = vmatmul.f32.gmra.mxu0 %v258
    %v487 = vpop.f32.mrf.mxu0
    %v488 = vadd.f32 0.0, %v487
    %489 = vmatmul.f32.gmra.mxu0 %v261
    %v490 = vpop.f32.mrf.mxu0
    %v491 = vadd.f32 0.0, %v490
    %492 = vmatmul.f32.gmra.mxu0 %v264
    %v493 = vpop.f32.mrf.mxu0
    %v494 = vadd.f32 0.0, %v493
    %495 = vmatmul.f32.gmra.mxu0 %v267
    %v496 = vpop.f32.mrf.mxu0
    %v497 = vadd.f32 0.0, %v496
    %498 = vmatmul.f32.gmra.mxu0 %v270
    %v499 = vpop.f32.mrf.mxu0
    %v500 = vadd.f32 0.0, %v499
    %501 = vmatmul.f32.gmra.mxu0 %v273
    %v502 = vpop.f32.mrf.mxu0
    %v503 = vadd.f32 0.0, %v502
    %504 = vmatmul.f32.gmra.mxu0 %v276
    %v505 = vpop.f32.mrf.mxu0
    %v506 = vadd.f32 0.0, %v505
    %507 = vmatmul.f32.gmra.mxu0 %v279
    %v508 = vpop.f32.mrf.mxu0
    %v509 = vadd.f32 0.0, %v508
    %510 = vmatmul.f32.gmra.mxu0 %v282
    %v511 = vpop.f32.mrf.mxu0
    %v512 = vadd.f32 0.0, %v511
    %513 = vmatmul.f32.gmra.mxu0 %v285
    %v514 = vpop.f32.mrf.mxu0
    %v515 = vadd.f32 0.0, %v514
    %516 = vmatmul.f32.gmra.mxu0 %v288
    %v517 = vpop.f32.mrf.mxu0
    %v518 = vadd.f32 0.0, %v517
    %519 = vmatmul.f32.gmra.mxu0 %v291
    %v520 = vpop.f32.mrf.mxu0
    %v521 = vadd.f32 0.0, %v520
    %522 = vmatmul.f32.gmra.mxu0 %v294
    %v523 = vpop.f32.mrf.mxu0
    %v524 = vadd.f32 0.0, %v523
    %525 = vmatmul.f32.gmra.mxu0 %v297
    %v526 = vpop.f32.mrf.mxu0
    %v527 = vadd.f32 0.0, %v526
    %528 = vmatmul.f32.gmra.mxu0 %v300
    %v529 = vpop.f32.mrf.mxu0
    %v530 = vadd.f32 0.0, %v529
    %531 = vmatmul.f32.gmra.mxu0 %v303
    %v532 = vpop.f32.mrf.mxu0
    %v533 = vadd.f32 0.0, %v532
    %534 = vmatmul.f32.gmra.mxu0 %v306
    %v535 = vpop.f32.mrf.mxu0
    %v536 = vadd.f32 0.0, %v535
    %537 = vmatmul.f32.gmra.mxu0 %v309
    %v538 = vpop.f32.mrf.mxu0
    %v539 = vadd.f32 0.0, %v538
    %540 = vmatmul.f32.gmra.mxu0 %v312
    %v541 = vpop.f32.mrf.mxu0
    %v542 = vadd.f32 0.0, %v541
    %543 = vmatmul.f32.gmra.mxu0 %v315
    %v544 = vpop.f32.mrf.mxu0
    %v545 = vadd.f32 0.0, %v544
    %546 = vmatmul.f32.gmra.mxu0 %v318
    %v547 = vpop.f32.mrf.mxu0
    %v548 = vadd.f32 0.0, %v547
    %549 = vmatmul.f32.gmra.mxu0 %v321
    %v550 = vpop.f32.mrf.mxu0
    %v551 = vadd.f32 0.0, %v550
    %552 = vmatmul.f32.gmra.mxu0 %v324
    %v553 = vpop.f32.mrf.mxu0
    %v554 = vadd.f32 0.0, %v553
    %555 = vmatmul.f32.gmra.mxu0 %v327
    %v556 = vpop.f32.mrf.mxu0
    %v557 = vadd.f32 0.0, %v556
    %558 = vmatmul.f32.gmra.mxu0 %v330
    %v559 = vpop.f32.mrf.mxu0
    %v560 = vadd.f32 0.0, %v559
    %561 = vdwg.mxu0
    %v562 = vmul.f32 %v354, %v144
    %v563 = vmul.f32 %v467, %v154
    %v564 = vmul.f32 %v357, %v144
    %v565 = vmul.f32 %v470, %v154
    %v566 = vmul.f32 %v360, %v144
    %v567 = vmul.f32 %v473, %v154
    %v568 = vmul.f32 %v363, %v144
    %v569 = vmul.f32 %v476, %v154
    %v570 = vmul.f32 %v366, %v144
    %v571 = vmul.f32 %v479, %v154
    %v572 = vmul.f32 %v369, %v144
    %v573 = vmul.f32 %v482, %v154
    %v574 = vmul.f32 %v372, %v144
    %v575 = vmul.f32 %v485, %v154
    %v576 = vmul.f32 %v375, %v144
    %v577 = vmul.f32 %v488, %v154
    %v578 = vmul.f32 %v378, %v144
    %v579 = vmul.f32 %v491, %v154
    %v580 = vmul.f32 %v381, %v144
    %v581 = vmul.f32 %v494, %v154
    %v582 = vmul.f32 %v384, %v144
    %v583 = vmul.f32 %v497, %v154
    %v584 = vmul.f32 %v387, %v144
    %v585 = vmul.f32 %v500, %v154
    %v586 = vmul.f32 %v390, %v144
    %v587 = vmul.f32 %v503, %v154
    %v588 = vmul.f32 %v393, %v144
    %v589 = vmul.f32 %v506, %v154
    %v590 = vmul.f32 %v396, %v144
    %v591 = vmul.f32 %v509, %v154
    %v592 = vmul.f32 %v399, %v144
    %v593 = vmul.f32 %v512, %v154
    %v594 = vmul.f32 %v402, %v144
    %v595 = vmul.f32 %v515, %v154
    %v596 = vmul.f32 %v405, %v144
    %v597 = vmul.f32 %v518, %v154
    %v598 = vmul.f32 %v408, %v144
    %v599 = vmul.f32 %v521, %v154
    %v600 = vmul.f32 %v411, %v144
    %v601 = vmul.f32 %v524, %v154
    %v602 = vmul.f32 %v414, %v144
    %v603 = vmul.f32 %v527, %v154
    %v604 = vmul.f32 %v417, %v144
    %v605 = vmul.f32 %v530, %v154
    %v606 = vmul.f32 %v420, %v144
    %v607 = vmul.f32 %v533, %v154
    %v608 = vmul.f32 %v423, %v144
    %v609 = vmul.f32 %v536, %v154
    %v610 = vmul.f32 %v426, %v144
    %v611 = vmul.f32 %v539, %v154
    %v612 = vmul.f32 %v429, %v144
    %v613 = vmul.f32 %v542, %v154
    %v614 = vmul.f32 %v432, %v144
    %v615 = vmul.f32 %v545, %v154
    %v616 = vmul.f32 %v435, %v144
    %v617 = vmul.f32 %v548, %v154
    %v618 = vmul.f32 %v438, %v144
    %v619 = vmul.f32 %v551, %v154
    %v620 = vmul.f32 %v441, %v144
    %v621 = vmul.f32 %v554, %v154
    %v622 = vmul.f32 %v444, %v144
    %v623 = vmul.f32 %v557, %v154
    %v624 = vmul.f32 %v447, %v144
    %v625 = vmul.f32 %v560, %v154
    %626 = vst [vmem:[#allocation8] sm:$0xff] %v562
    %627 = vst [vmem:[#allocation8 + $0x8] sm:$0xff] %v563
    %628 = vst [vmem:[#allocation8 + $0x10] sm:$0xff] %v564
    %629 = vst [vmem:[#allocation8 + $0x18] sm:$0xff] %v565
    %630 = vst [vmem:[#allocation8 + $0x20] sm:$0xff] %v566
    %631 = vst [vmem:[#allocation8 + $0x28] sm:$0xff] %v567
    %632 = vst [vmem:[#allocation8 + $0x30] sm:$0xff] %v568
    %633 = vst [vmem:[#allocation8 + $0x38] sm:$0xff] %v569
    %634 = vst [vmem:[#allocation8 + $0x40] sm:$0xff] %v570
    %635 = vst [vmem:[#allocation8 + $0x48] sm:$0xff] %v571
    %636 = vst [vmem:[#allocation8 + $0x50] sm:$0xff] %v572
    %637 = vst [vmem:[#allocation8 + $0x58] sm:$0xff] %v573
    %638 = vst [vmem:[#allocation8 + $0x60] sm:$0xff] %v574
    %639 = vst [vmem:[#allocation8 + $0x68] sm:$0xff] %v575
    %640 = vst [vmem:[#allocation8 + $0x70] sm:$0xff] %v576
    %641 = vst [vmem:[#allocation8 + $0x78] sm:$0xff] %v577
    %642 = vst [vmem:[#allocation8 + $0x80] sm:$0xff] %v578
    %643 = vst [vmem:[#allocation8 + $0x88] sm:$0xff] %v579
    %644 = vst [vmem:[#allocation8 + $0x90] sm:$0xff] %v580
    %645 = vst [vmem:[#allocation8 + $0x98] sm:$0xff] %v581
    %646 = vst [vmem:[#allocation8 + $0xa0] sm:$0xff] %v582
    %647 = vst [vmem:[#allocation8 + $0xa8] sm:$0xff] %v583
    %648 = vst [vmem:[#allocation8 + $0xb0] sm:$0xff] %v584
    %649 = vst [vmem:[#allocation8 + $0xb8] sm:$0xff] %v585
    %650 = vst [vmem:[#allocation8 + $0xc0] sm:$0xff] %v586
    %651 = vst [vmem:[#allocation8 + $0xc8] sm:$0xff] %v587
    %652 = vst [vmem:[#allocation8 + $0xd0] sm:$0xff] %v588
    %653 = vst [vmem:[#allocation8 + $0xd8] sm:$0xff] %v589
    %654 = vst [vmem:[#allocation8 + $0xe0] sm:$0xff] %v590
    %655 = vst [vmem:[#allocation8 + $0xe8] sm:$0xff] %v591
    %656 = vst [vmem:[#allocation8 + $0xf0] sm:$0xff] %v592
    %657 = vst [vmem:[#allocation8 + $0xf8] sm:$0xff] %v593
    %658 = vst [vmem:[#allocation8 + $0x100] sm:$0xff] %v594
    %659 = vst [vmem:[#allocation8 + $0x108] sm:$0xff] %v595
    %660 = vst [vmem:[#allocation8 + $0x110] sm:$0xff] %v596
    %661 = vst [vmem:[#allocation8 + $0x118] sm:$0xff] %v597
    %662 = vst [vmem:[#allocation8 + $0x120] sm:$0xff] %v598
    %663 = vst [vmem:[#allocation8 + $0x128] sm:$0xff] %v599
    %664 = vst [vmem:[#allocation8 + $0x130] sm:$0xff] %v600
    %665 = vst [vmem:[#allocation8 + $0x138] sm:$0xff] %v601
    %666 = vst [vmem:[#allocation8 + $0x140] sm:$0xff] %v602
    %667 = vst [vmem:[#allocation8 + $0x148] sm:$0xff] %v603
    %668 = vst [vmem:[#allocation8 + $0x150] sm:$0xff] %v604
    %669 = vst [vmem:[#allocation8 + $0x158] sm:$0xff] %v605
    %670 = vst [vmem:[#allocation8 + $0x160] sm:$0xff] %v606
    %671 = vst [vmem:[#allocation8 + $0x168] sm:$0xff] %v607
    %672 = vst [vmem:[#allocation8 + $0x170] sm:$0xff] %v608
    %673 = vst [vmem:[#allocation8 + $0x178] sm:$0xff] %v609
    %674 = vst [vmem:[#allocation8 + $0x180] sm:$0xff] %v610
    %675 = vst [vmem:[#allocation8 + $0x188] sm:$0xff] %v611
    %676 = vst [vmem:[#allocation8 + $0x190] sm:$0xff] %v612
    %677 = vst [vmem:[#allocation8 + $0x198] sm:$0xff] %v613
    %678 = vst [vmem:[#allocation8 + $0x1a0] sm:$0xff] %v614
    %679 = vst [vmem:[#allocation8 + $0x1a8] sm:$0xff] %v615
    %680 = vst [vmem:[#allocation8 + $0x1b0] sm:$0xff] %v616
    %681 = vst [vmem:[#allocation8 + $0x1b8] sm:$0xff] %v617
    %682 = vst [vmem:[#allocation8 + $0x1c0] sm:$0xff] %v618
    %683 = vst [vmem:[#allocation8 + $0x1c8] sm:$0xff] %v619
    %684 = vst [vmem:[#allocation8 + $0x1d0] sm:$0xff] %v620
    %685 = vst [vmem:[#allocation8 + $0x1d8] sm:$0xff] %v621
    %686 = vst [vmem:[#allocation8 + $0x1e0] sm:$0xff] %v622
    %687 = vst [vmem:[#allocation8 + $0x1e8] sm:$0xff] %v623
    %688 = vst [vmem:[#allocation8 + $0x1f0] sm:$0xff] %v624
    %689 = vst [vmem:[#allocation8 + $0x1f8] sm:$0xff] %v625
    %v690 = vmul.f32 %v67, %v67
    %v692 = vperm.slane %v690, 0
    %v693 = vperm.slane %v690, 1
    %vm696 = vcmask 1040384
    %v697 = vsel %vm696, %v692, 0.0
    %v698 = vsel %vm696, %v693, 0.0
    %v699 = vadd.f32 %v697, %v698
    %700 = vadd.xlane.f32.xlu0 %v699
    %v701 = vpop.xlane.xlu0 %700
    %v702 = vrot.slane %v701, 4
    %v703 = vadd.f32 %v701, %v702
    %v704 = vrot.slane %v703, 2
    %v705 = vadd.f32 %v703, %v704
    %v706 = vrot.slane %v705, 1
    %v707 = vadd.f32 %v705, %v706
    %s708 = vtos %v707
    %s709 = sadd.f32 %s708, 1e-05
    %v711 = vperm.slane %v67, 0
    %v712 = vperm.slane %v67, 1
    %v715 = vmul.f32 %v144, %v711
    %v716 = vmul.f32 %v154, %v712
    %v717 = vperm.slane %v715, 0
    %v718 = vperm.slane %v716, 0
    %v721 = vrot.slane %v718, 4
    %v722 = vsel %vm75, %v717, %v721
    %v724 = vmul.f32 %v65, %v722
    %726 = vst [vmem:[#allocation1] ss:$2 sm:$0xff] %v724
    %v727 = vld.sshfl [vmem:[#allocation1] sm:$0xff pattern:$0x75316420]
    %v728 = vld.sshfl [vmem:[#allocation1 + $0x8] sm:$0xff pattern:$0x75316420]
    %v731 = vsel %vm75, %v727, 0.0
    %v732 = vsel %vm75, %v728, 0.0
    %v733 = vadd.f32 %v731, %v732
    %734 = vadd.xlane.f32.xlu0 %v733
    %v735 = vpop.xlane.xlu0 %734
    %v738 = vunpack.c.l.s4 839922192
    %v739 = vunpack.c.0.s8 %v738
    %v740 = vperm.slane %v735, %v739
    %v742 = vmul.f32 %v160, %v740
    %744 = vst [vmem:[#allocation1] ss:$2 sm:$0xff] %v742
    %v745 = vld.sshfl [vmem:[#allocation1] sm:$0xff pattern:$0x75316420]
    %v746 = vld.sshfl [vmem:[#allocation1 + $0x8] sm:$0xff pattern:$0x75316420]
    %v749 = vsel %vm75, %v745, 0.0
    %v750 = vrot.slane %v749, 4
    %v751 = vadd.f32 %v749, %v750
    %v752 = vrot.slane %v751, 2
    %v753 = vadd.f32 %v751, %v752
    %v754 = vrot.slane %v753, 1
    %v755 = vadd.f32 %v753, %v754
    %v756 = vsel %vm75, %v746, 0.0
    %v757 = vrot.slane %v756, 4
    %v758 = vadd.f32 %v756, %v757
    %v759 = vrot.slane %v758, 2
    %v760 = vadd.f32 %v758, %v759
    %v761 = vrot.slane %v760, 1
    %v762 = vadd.f32 %v760, %v761
    %v763 = vstv %s709
    %v764 = vrcp.pop %v763
    %v765 = vmul.f32 %v763, %v764
    %v766 = vsub.f32 1.0, %v765
    %v767 = vmul.f32 %v764, %v766
    %v768 = vadd.f32 %v764, %v767
    %vm769 = vweird.f32 %v763
    %vm770 = vweird.f32 %v764
    %vm771 = vmor %vm769, %vm770
    %v772 = vsel %vm771, %v764, %v768
    %v773 = vand.u32 2147483647, %v763
    %vm774 = vcmp.eq.f32.partialorder %v773, 8.507059e+37
    %v775 = vand.u32 %v763, 2147483648
    %v776 = vor.u32 1.1754944e-38, %v775
    %v777 = vsel %vm774, %v776, %v772
    %v778 = vmul.f32 %v755, %v777
    %v779 = vmul.f32 %v762, %v777
    %v780 = vmin.f32 %v778, %v779
    %781 = vmin.xlane.f32.xlu0 %v780
    %v782 = vpop.xlane.xlu0 %781
    %s783 = vtos %v782
    %v784 = vmax.f32 %v778, %v779
    %785 = vmax.xlane.f32.xlu0 %v784
    %v786 = vpop.xlane.xlu0 %785
    %s787 = vtos %v786
    %v788 = vstv %s783
    %v789 = vsub.f32 %v778, %v788
    %v790 = vsub.f32 %v779, %v788
    %s791 = ssub.f32 %s787, %s783
    %s792 = sadd.f32 %s791, 1e-05
    %v793 = vstv %s792
    %v794 = vrcp.pop %v793
    %v795 = vmul.f32 %v793, %v794
    %v796 = vsub.f32 1.0, %v795
    %v797 = vmul.f32 %v794, %v796
    %v798 = vadd.f32 %v794, %v797
    %vm799 = vweird.f32 %v793
    %vm800 = vweird.f32 %v794
    %vm801 = vmor %vm799, %vm800
    %v802 = vsel %vm801, %v794, %v798
    %v803 = vand.u32 2147483647, %v793
    %vm804 = vcmp.eq.f32.partialorder %v803, 8.507059e+37
    %v805 = vand.u32 %v793, 2147483648
    %v806 = vor.u32 1.1754944e-38, %v805
    %v807 = vsel %vm804, %v806, %v802
    %v808 = vmul.f32 %v789, %v807
    %v809 = vmul.f32 %v790, %v807
    %v812 = vrot.slane %v809, 7
    %v813 = vsel %vm696, %v808, %v812
    %v815 = vlaneseq
    %vm816 = vcmp.ge.s32.totalorder %v815, 0
    %vm817 = vcmp.lt.s32.totalorder %v815, 256
    %vm818 = vmand %vm816, %vm817
    %819 = vst.msk [vmem:[#allocation9] sm:$0x3] %vm818, %v813
    %s820 = scalar_lea.vmem [#allocation2], 8
    %v821 = vld [vmem:[%s820] sm:$0xff]
    %s822 = scalar_lea.vmem [#allocation5], 8
    %v823 = vld [vmem:[%s822] sm:$0xff]
    %s824 = scalar_lea.vmem [#allocation7], 2
    %v825 = vld [vmem:[%s824] sm:$0x3]
    %v826 = vmul.f32 %v823, %v823
    %828 = vst [vmem:[#allocation1] ss:$2 sm:$0xff] %v826
    %v829 = vld.sshfl [vmem:[#allocation1] sm:$0xff pattern:$0x75316420]
    %v830 = vld.sshfl [vmem:[#allocation1 + $0x8] sm:$0xff pattern:$0x75316420]
    %v833 = vsel %vm75, %v829, 0.0
    %v834 = vrot.slane %v833, 4
    %v835 = vadd.f32 %v833, %v834
    %v836 = vrot.slane %v835, 2
    %v837 = vadd.f32 %v835, %v836
    %v838 = vrot.slane %v837, 1
    %v839 = vadd.f32 %v837, %v838
    %v840 = vsel %vm75, %v830, 0.0
    %v841 = vrot.slane %v840, 4
    %v842 = vadd.f32 %v840, %v841
    %v843 = vrot.slane %v842, 2
    %v844 = vadd.f32 %v842, %v843
    %v845 = vrot.slane %v844, 1
    %v846 = vadd.f32 %v844, %v845
    %v847 = vadd.f32 %v839, 1e-12
    %v848 = vadd.f32 %v846, 1e-12
    %v849 = vrsqrt.pop %v847
    %v850 = vmul.f32 %v849, %v847
    %v851 = vmul.f32 %v850, %v849
    %v852 = vmul.f32 0.5, %v851
    %v853 = vsub.f32 1.5, %v852
    %v854 = vmul.f32 %v849, %v853
    %vm855 = vweird.f32 %v847
    %vm856 = vweird.f32 %v849
    %vm857 = vmor %vm855, %vm856
    %v858 = vsel %vm857, %v849, %v854
    %v859 = vrsqrt.pop %v848
    %v860 = vmul.f32 %v859, %v848
    %v861 = vmul.f32 %v860, %v859
    %v862 = vmul.f32 0.5, %v861
    %v863 = vsub.f32 1.5, %v862
    %v864 = vmul.f32 %v859, %v863
    %vm865 = vweird.f32 %v848
    %vm866 = vweird.f32 %v859
    %vm867 = vmor %vm865, %vm866
    %v868 = vsel %vm867, %v859, %v864
    %v869 = vmul.f32 %v821, %v821
    %871 = vst [vmem:[#allocation1] ss:$2 sm:$0xff] %v869
    %v872 = vld.sshfl [vmem:[#allocation1] sm:$0xff pattern:$0x75316420]
    %v873 = vld.sshfl [vmem:[#allocation1 + $0x8] sm:$0xff pattern:$0x75316420]
    %v876 = vsel %vm75, %v872, 0.0
    %v877 = vrot.slane %v876, 4
    %v878 = vadd.f32 %v876, %v877
    %v879 = vrot.slane %v878, 2
    %v880 = vadd.f32 %v878, %v879
    %v881 = vrot.slane %v880, 1
    %v882 = vadd.f32 %v880, %v881
    %v883 = vsel %vm75, %v873, 0.0
    %v884 = vrot.slane %v883, 4
    %v885 = vadd.f32 %v883, %v884
    %v886 = vrot.slane %v885, 2
    %v887 = vadd.f32 %v885, %v886
    %v888 = vrot.slane %v887, 1
    %v889 = vadd.f32 %v887, %v888
    %v890 = vadd.f32 %v882, 1e-12
    %v891 = vadd.f32 %v889, 1e-12
    %v892 = vrsqrt.pop %v890
    %v893 = vmul.f32 %v892, %v890
    %v894 = vmul.f32 %v893, %v892
    %v895 = vmul.f32 0.5, %v894
    %v896 = vsub.f32 1.5, %v895
    %v897 = vmul.f32 %v892, %v896
    %vm898 = vweird.f32 %v890
    %vm899 = vweird.f32 %v892
    %vm900 = vmor %vm898, %vm899
    %v901 = vsel %vm900, %v892, %v897
    %v902 = vrsqrt.pop %v891
    %v903 = vmul.f32 %v902, %v891
    %v904 = vmul.f32 %v903, %v902
    %v905 = vmul.f32 0.5, %v904
    %v906 = vsub.f32 1.5, %v905
    %v907 = vmul.f32 %v902, %v906
    %vm908 = vweird.f32 %v891
    %vm909 = vweird.f32 %v902
    %vm910 = vmor %vm908, %vm909
    %v911 = vsel %vm910, %v902, %v907
    %v914 = vrot.slane %v868, 4
    %v915 = vsel %vm75, %v858, %v914
    %v917 = vmul.f32 %v823, %v915
    %919 = vst [vmem:[#allocation1] ss:$2 sm:$0xff] %v917
    %v920 = vld.sshfl [vmem:[#allocation1] sm:$0xff pattern:$0x75316420]
    %v921 = vld.sshfl [vmem:[#allocation1 + $0x8] sm:$0xff pattern:$0x75316420]
    %924 = vxpose.xlu0.b32.start [1/16] %v920, 128
    %925 = vxpose.xlu0.b32.cont [2/16] 0.0, 128
    %926 = vxpose.xlu0.b32.cont [3/16] 0.0, 128
    %927 = vxpose.xlu0.b32.cont [4/16] 0.0, 128
    %928 = vxpose.xlu0.b32.cont [5/16] 0.0, 128
    %929 = vxpose.xlu0.b32.cont [6/16] 0.0, 128
    %930 = vxpose.xlu0.b32.cont [7/16] 0.0, 128
    %931 = vxpose.xlu0.b32.cont [8/16] 0.0, 128
    %932 = vxpose.xlu0.b32.cont [9/16] 0.0, 128
    %933 = vxpose.xlu0.b32.cont [10/16] 0.0, 128
    %934 = vxpose.xlu0.b32.cont [11/16] 0.0, 128
    %935 = vxpose.xlu0.b32.cont [12/16] 0.0, 128
    %936 = vxpose.xlu0.b32.cont [13/16] 0.0, 128
    %937 = vxpose.xlu0.b32.cont [14/16] 0.0, 128
    %938 = vxpose.xlu0.b32.cont [15/16] 0.0, 128
    %939 = vxpose.xlu0.b32.end [16/16] 0.0, 128
    %v940 = vpop.trf.xlu0
    %v941 = vpop.trf.xlu0
    %v942 = vpop.trf.xlu0
    %v943 = vpop.trf.xlu0
    %v944 = vpop.trf.xlu0
    %v945 = vpop.trf.xlu0
    %v946 = vpop.trf.xlu0
    %v947 = vpop.trf.xlu0
    %v948 = vpop.trf.xlu0
    %v949 = vpop.trf.xlu0
    %v950 = vpop.trf.xlu0
    %v951 = vpop.trf.xlu0
    %v952 = vpop.trf.xlu0
    %v953 = vpop.trf.xlu0
    %v954 = vpop.trf.xlu0
    %v955 = vpop.trf.xlu0
    %956 = vxpose.xlu0.b32.start [1/16] %v921, 128
    %957 = vxpose.xlu0.b32.cont [2/16] 0.0, 128
    %958 = vxpose.xlu0.b32.cont [3/16] 0.0, 128
    %959 = vxpose.xlu0.b32.cont [4/16] 0.0, 128
    %960 = vxpose.xlu0.b32.cont [5/16] 0.0, 128
    %961 = vxpose.xlu0.b32.cont [6/16] 0.0, 128
    %962 = vxpose.xlu0.b32.cont [7/16] 0.0, 128
    %963 = vxpose.xlu0.b32.cont [8/16] 0.0, 128
    %964 = vxpose.xlu0.b32.cont [9/16] 0.0, 128
    %965 = vxpose.xlu0.b32.cont [10/16] 0.0, 128
    %966 = vxpose.xlu0.b32.cont [11/16] 0.0, 128
    %967 = vxpose.xlu0.b32.cont [12/16] 0.0, 128
    %968 = vxpose.xlu0.b32.cont [13/16] 0.0, 128
    %969 = vxpose.xlu0.b32.cont [14/16] 0.0, 128
    %970 = vxpose.xlu0.b32.cont [15/16] 0.0, 128
    %971 = vxpose.xlu0.b32.end [16/16] 0.0, 128
    %v972 = vpop.trf.xlu0
    %v973 = vpop.trf.xlu0
    %v974 = vpop.trf.xlu0
    %v975 = vpop.trf.xlu0
    %v976 = vpop.trf.xlu0
    %v977 = vpop.trf.xlu0
    %v978 = vpop.trf.xlu0
    %v979 = vpop.trf.xlu0
    %v980 = vpop.trf.xlu0
    %v981 = vpop.trf.xlu0
    %v982 = vpop.trf.xlu0
    %v983 = vpop.trf.xlu0
    %v984 = vpop.trf.xlu0
    %v985 = vpop.trf.xlu0
    %v986 = vpop.trf.xlu0
    %v987 = vpop.trf.xlu0
    %989 = vst [vmem:[#allocation1] ss:$2 sm:$0xff] %v821
    %v990 = vld.sshfl [vmem:[#allocation1] sm:$0xff pattern:$0x75316420]
    %v991 = vld.sshfl [vmem:[#allocation1 + $0x8] sm:$0xff pattern:$0x75316420]
    %v993 = vsel %vm235, %v940, 0
    %v996 = vsel %vm235, %v941, 0
    %v999 = vsel %vm235, %v942, 0
    %v1002 = vsel %vm235, %v943, 0
    %v1005 = vsel %vm235, %v944, 0
    %v1008 = vsel %vm235, %v945, 0
    %v1011 = vsel %vm235, %v946, 0
    %v1014 = vsel %vm235, %v947, 0
    %v1017 = vsel %vm235, %v948, 0
    %v1020 = vsel %vm235, %v949, 0
    %v1023 = vsel %vm235, %v950, 0
    %v1026 = vsel %vm235, %v951, 0
    %v1029 = vsel %vm235, %v952, 0
    %v1032 = vsel %vm235, %v953, 0
    %v1035 = vsel %vm235, %v954, 0
    %v1038 = vsel %vm235, %v955, 0
    %v1041 = vsel %vm235, %v972, 0
    %v1044 = vsel %vm235, %v973, 0
    %v1047 = vsel %vm235, %v974, 0
    %v1050 = vsel %vm235, %v975, 0
    %v1053 = vsel %vm235, %v976, 0
    %v1056 = vsel %vm235, %v977, 0
    %v1059 = vsel %vm235, %v978, 0
    %v1062 = vsel %vm235, %v979, 0
    %v1065 = vsel %vm235, %v980, 0
    %v1068 = vsel %vm235, %v981, 0
    %v1071 = vsel %vm235, %v982, 0
    %v1074 = vsel %vm235, %v983, 0
    %v1077 = vsel %vm235, %v984, 0
    %v1080 = vsel %vm235, %v985, 0
    %v1083 = vsel %vm235, %v986, 0
    %v1086 = vsel %vm235, %v987, 0
    %v1088 = vsel %vm75, %v990, 0
    %v1090 = vsel %vm75, %v991, 0
    %1092 = vmatpush.msra.mxu0 0.0
    %1093 = vmatpush.msra.mxu0 0.0
    %1094 = vmatpush.msra.mxu0 0.0
    %1095 = vmatpush.msra.mxu0 0.0
    %1096 = vmatpush.msra.mxu0 0.0
    %1097 = vmatpush.msra.mxu0 0.0
    %1098 = vmatpush.msra.mxu0 0.0
    %1099 = vmatpush.msra.mxu0 0.0
    %1100 = vmatpush.msra.mxu0 0.0
    %1101 = vmatpush.msra.mxu0 0.0
    %1102 = vmatpush.msra.mxu0 0.0
    %1103 = vmatpush.msra.mxu0 0.0
    %1104 = vmatpush.msra.mxu0 0.0
    %1105 = vmatpush.msra.mxu0 0.0
    %1106 = vmatpush.msra.mxu0 0.0
    %1107 = vmatpush.msra.mxu0 %v1088
    %1108 = vmatmul.f32.gmra.mxu0 %v993
    %v1109 = vpop.f32.mrf.mxu0
    %v1110 = vadd.f32 0.0, %v1109
    %1111 = vmatmul.f32.gmra.mxu0 %v996
    %v1112 = vpop.f32.mrf.mxu0
    %v1113 = vadd.f32 0.0, %v1112
    %1114 = vmatmul.f32.gmra.mxu0 %v999
    %v1115 = vpop.f32.mrf.mxu0
    %v1116 = vadd.f32 0.0, %v1115
    %1117 = vmatmul.f32.gmra.mxu0 %v1002
    %v1118 = vpop.f32.mrf.mxu0
    %v1119 = vadd.f32 0.0, %v1118
    %1120 = vmatmul.f32.gmra.mxu0 %v1005
    %v1121 = vpop.f32.mrf.mxu0
    %v1122 = vadd.f32 0.0, %v1121
    %1123 = vmatmul.f32.gmra.mxu0 %v1008
    %v1124 = vpop.f32.mrf.mxu0
    %v1125 = vadd.f32 0.0, %v1124
    %1126 = vmatmul.f32.gmra.mxu0 %v1011
    %v1127 = vpop.f32.mrf.mxu0
    %v1128 = vadd.f32 0.0, %v1127
    %1129 = vmatmul.f32.gmra.mxu0 %v1014
    %v1130 = vpop.f32.mrf.mxu0
    %v1131 = vadd.f32 0.0, %v1130
    %1132 = vmatmul.f32.gmra.mxu0 %v1017
    %v1133 = vpop.f32.mrf.mxu0
    %v1134 = vadd.f32 0.0, %v1133
    %1135 = vmatmul.f32.gmra.mxu0 %v1020
    %v1136 = vpop.f32.mrf.mxu0
    %v1137 = vadd.f32 0.0, %v1136
    %1138 = vmatmul.f32.gmra.mxu0 %v1023
    %v1139 = vpop.f32.mrf.mxu0
    %v1140 = vadd.f32 0.0, %v1139
    %1141 = vmatmul.f32.gmra.mxu0 %v1026
    %v1142 = vpop.f32.mrf.mxu0
    %v1143 = vadd.f32 0.0, %v1142
    %1144 = vmatmul.f32.gmra.mxu0 %v1029
    %v1145 = vpop.f32.mrf.mxu0
    %v1146 = vadd.f32 0.0, %v1145
    %1147 = vmatmul.f32.gmra.mxu0 %v1032
    %v1148 = vpop.f32.mrf.mxu0
    %v1149 = vadd.f32 0.0, %v1148
    %1150 = vmatmul.f32.gmra.mxu0 %v1035
    %v1151 = vpop.f32.mrf.mxu0
    %v1152 = vadd.f32 0.0, %v1151
    %1153 = vmatmul.f32.gmra.mxu0 %v1038
    %v1154 = vpop.f32.mrf.mxu0
    %v1155 = vadd.f32 0.0, %v1154
    %1156 = vmatmul.f32.gmra.mxu0 %v1041
    %v1157 = vpop.f32.mrf.mxu0
    %v1158 = vadd.f32 0.0, %v1157
    %1159 = vmatmul.f32.gmra.mxu0 %v1044
    %v1160 = vpop.f32.mrf.mxu0
    %v1161 = vadd.f32 0.0, %v1160
    %1162 = vmatmul.f32.gmra.mxu0 %v1047
    %v1163 = vpop.f32.mrf.mxu0
    %v1164 = vadd.f32 0.0, %v1163
    %1165 = vmatmul.f32.gmra.mxu0 %v1050
    %v1166 = vpop.f32.mrf.mxu0
    %v1167 = vadd.f32 0.0, %v1166
    %1168 = vmatmul.f32.gmra.mxu0 %v1053
    %v1169 = vpop.f32.mrf.mxu0
    %v1170 = vadd.f32 0.0, %v1169
    %1171 = vmatmul.f32.gmra.mxu0 %v1056
    %v1172 = vpop.f32.mrf.mxu0
    %v1173 = vadd.f32 0.0, %v1172
    %1174 = vmatmul.f32.gmra.mxu0 %v1059
    %v1175 = vpop.f32.mrf.mxu0
    %v1176 = vadd.f32 0.0, %v1175
    %1177 = vmatmul.f32.gmra.mxu0 %v1062
    %v1178 = vpop.f32.mrf.mxu0
    %v1179 = vadd.f32 0.0, %v1178
    %1180 = vmatmul.f32.gmra.mxu0 %v1065
    %v1181 = vpop.f32.mrf.mxu0
    %v1182 = vadd.f32 0.0, %v1181
    %1183 = vmatmul.f32.gmra.mxu0 %v1068
    %v1184 = vpop.f32.mrf.mxu0
    %v1185 = vadd.f32 0.0, %v1184
    %1186 = vmatmul.f32.gmra.mxu0 %v1071
    %v1187 = vpop.f32.mrf.mxu0
    %v1188 = vadd.f32 0.0, %v1187
    %1189 = vmatmul.f32.gmra.mxu0 %v1074
    %v1190 = vpop.f32.mrf.mxu0
    %v1191 = vadd.f32 0.0, %v1190
    %1192 = vmatmul.f32.gmra.mxu0 %v1077
    %v1193 = vpop.f32.mrf.mxu0
    %v1194 = vadd.f32 0.0, %v1193
    %1195 = vmatmul.f32.gmra.mxu0 %v1080
    %v1196 = vpop.f32.mrf.mxu0
    %v1197 = vadd.f32 0.0, %v1196
    %1198 = vmatmul.f32.gmra.mxu0 %v1083
    %v1199 = vpop.f32.mrf.mxu0
    %v1200 = vadd.f32 0.0, %v1199
    %1201 = vmatmul.f32.gmra.mxu0 %v1086
    %v1202 = vpop.f32.mrf.mxu0
    %v1203 = vadd.f32 0.0, %v1202
    %1204 = vdwg.mxu0
    %1205 = vmatpush.msra.mxu0 0.0
    %1206 = vmatpush.msra.mxu0 0.0
    %1207 = vmatpush.msra.mxu0 0.0
    %1208 = vmatpush.msra.mxu0 0.0
    %1209 = vmatpush.msra.mxu0 0.0
    %1210 = vmatpush.msra.mxu0 0.0
    %1211 = vmatpush.msra.mxu0 0.0
    %1212 = vmatpush.msra.mxu0 0.0
    %1213 = vmatpush.msra.mxu0 0.0
    %1214 = vmatpush.msra.mxu0 0.0
    %1215 = vmatpush.msra.mxu0 0.0
    %1216 = vmatpush.msra.mxu0 0.0
    %1217 = vmatpush.msra.mxu0 0.0
    %1218 = vmatpush.msra.mxu0 0.0
    %1219 = vmatpush.msra.mxu0 0.0
    %1220 = vmatpush.msra.mxu0 %v1090
    %1221 = vmatmul.f32.gmra.mxu0 %v993
    %v1222 = vpop.f32.mrf.mxu0
    %v1223 = vadd.f32 0.0, %v1222
    %1224 = vmatmul.f32.gmra.mxu0 %v996
    %v1225 = vpop.f32.mrf.mxu0
    %v1226 = vadd.f32 0.0, %v1225
    %1227 = vmatmul.f32.gmra.mxu0 %v999
    %v1228 = vpop.f32.mrf.mxu0
    %v1229 = vadd.f32 0.0, %v1228
    %1230 = vmatmul.f32.gmra.mxu0 %v1002
    %v1231 = vpop.f32.mrf.mxu0
    %v1232 = vadd.f32 0.0, %v1231
    %1233 = vmatmul.f32.gmra.mxu0 %v1005
    %v1234 = vpop.f32.mrf.mxu0
    %v1235 = vadd.f32 0.0, %v1234
    %1236 = vmatmul.f32.gmra.mxu0 %v1008
    %v1237 = vpop.f32.mrf.mxu0
    %v1238 = vadd.f32 0.0, %v1237
    %1239 = vmatmul.f32.gmra.mxu0 %v1011
    %v1240 = vpop.f32.mrf.mxu0
    %v1241 = vadd.f32 0.0, %v1240
    %1242 = vmatmul.f32.gmra.mxu0 %v1014
    %v1243 = vpop.f32.mrf.mxu0
    %v1244 = vadd.f32 0.0, %v1243
    %1245 = vmatmul.f32.gmra.mxu0 %v1017
    %v1246 = vpop.f32.mrf.mxu0
    %v1247 = vadd.f32 0.0, %v1246
    %1248 = vmatmul.f32.gmra.mxu0 %v1020
    %v1249 = vpop.f32.mrf.mxu0
    %v1250 = vadd.f32 0.0, %v1249
    %1251 = vmatmul.f32.gmra.mxu0 %v1023
    %v1252 = vpop.f32.mrf.mxu0
    %v1253 = vadd.f32 0.0, %v1252
    %1254 = vmatmul.f32.gmra.mxu0 %v1026
    %v1255 = vpop.f32.mrf.mxu0
    %v1256 = vadd.f32 0.0, %v1255
    %1257 = vmatmul.f32.gmra.mxu0 %v1029
    %v1258 = vpop.f32.mrf.mxu0
    %v1259 = vadd.f32 0.0, %v1258
    %1260 = vmatmul.f32.gmra.mxu0 %v1032
    %v1261 = vpop.f32.mrf.mxu0
    %v1262 = vadd.f32 0.0, %v1261
    %1263 = vmatmul.f32.gmra.mxu0 %v1035
    %v1264 = vpop.f32.mrf.mxu0
    %v1265 = vadd.f32 0.0, %v1264
    %1266 = vmatmul.f32.gmra.mxu0 %v1038
    %v1267 = vpop.f32.mrf.mxu0
    %v1268 = vadd.f32 0.0, %v1267
    %1269 = vmatmul.f32.gmra.mxu0 %v1041
    %v1270 = vpop.f32.mrf.mxu0
    %v1271 = vadd.f32 0.0, %v1270
    %1272 = vmatmul.f32.gmra.mxu0 %v1044
    %v1273 = vpop.f32.mrf.mxu0
    %v1274 = vadd.f32 0.0, %v1273
    %1275 = vmatmul.f32.gmra.mxu0 %v1047
    %v1276 = vpop.f32.mrf.mxu0
    %v1277 = vadd.f32 0.0, %v1276
    %1278 = vmatmul.f32.gmra.mxu0 %v1050
    %v1279 = vpop.f32.mrf.mxu0
    %v1280 = vadd.f32 0.0, %v1279
    %1281 = vmatmul.f32.gmra.mxu0 %v1053
    %v1282 = vpop.f32.mrf.mxu0
    %v1283 = vadd.f32 0.0, %v1282
    %1284 = vmatmul.f32.gmra.mxu0 %v1056
    %v1285 = vpop.f32.mrf.mxu0
    %v1286 = vadd.f32 0.0, %v1285
    %1287 = vmatmul.f32.gmra.mxu0 %v1059
    %v1288 = vpop.f32.mrf.mxu0
    %v1289 = vadd.f32 0.0, %v1288
    %1290 = vmatmul.f32.gmra.mxu0 %v1062
    %v1291 = vpop.f32.mrf.mxu0
    %v1292 = vadd.f32 0.0, %v1291
    %1293 = vmatmul.f32.gmra.mxu0 %v1065
    %v1294 = vpop.f32.mrf.mxu0
    %v1295 = vadd.f32 0.0, %v1294
    %1296 = vmatmul.f32.gmra.mxu0 %v1068
    %v1297 = vpop.f32.mrf.mxu0
    %v1298 = vadd.f32 0.0, %v1297
    %1299 = vmatmul.f32.gmra.mxu0 %v1071
    %v1300 = vpop.f32.mrf.mxu0
    %v1301 = vadd.f32 0.0, %v1300
    %1302 = vmatmul.f32.gmra.mxu0 %v1074
    %v1303 = vpop.f32.mrf.mxu0
    %v1304 = vadd.f32 0.0, %v1303
    %1305 = vmatmul.f32.gmra.mxu0 %v1077
    %v1306 = vpop.f32.mrf.mxu0
    %v1307 = vadd.f32 0.0, %v1306
    %1308 = vmatmul.f32.gmra.mxu0 %v1080
    %v1309 = vpop.f32.mrf.mxu0
    %v1310 = vadd.f32 0.0, %v1309
    %1311 = vmatmul.f32.gmra.mxu0 %v1083
    %v1312 = vpop.f32.mrf.mxu0
    %v1313 = vadd.f32 0.0, %v1312
    %1314 = vmatmul.f32.gmra.mxu0 %v1086
    %v1315 = vpop.f32.mrf.mxu0
    %v1316 = vadd.f32 0.0, %v1315
    %1317 = vdwg.mxu0
    %v1318 = vmul.f32 %v1110, %v901
    %v1319 = vmul.f32 %v1223, %v911
    %v1320 = vmul.f32 %v1113, %v901
    %v1321 = vmul.f32 %v1226, %v911
    %v1322 = vmul.f32 %v1116, %v901
    %v1323 = vmul.f32 %v1229, %v911
    %v1324 = vmul.f32 %v1119, %v901
    %v1325 = vmul.f32 %v1232, %v911
    %v1326 = vmul.f32 %v1122, %v901
    %v1327 = vmul.f32 %v1235, %v911
    %v1328 = vmul.f32 %v1125, %v901
    %v1329 = vmul.f32 %v1238, %v911
    %v1330 = vmul.f32 %v1128, %v901
    %v1331 = vmul.f32 %v1241, %v911
    %v1332 = vmul.f32 %v1131, %v901
    %v1333 = vmul.f32 %v1244, %v911
    %v1334 = vmul.f32 %v1134, %v901
    %v1335 = vmul.f32 %v1247, %v911
    %v1336 = vmul.f32 %v1137, %v901
    %v1337 = vmul.f32 %v1250, %v911
    %v1338 = vmul.f32 %v1140, %v901
    %v1339 = vmul.f32 %v1253, %v911
    %v1340 = vmul.f32 %v1143, %v901
    %v1341 = vmul.f32 %v1256, %v911
    %v1342 = vmul.f32 %v1146, %v901
    %v1343 = vmul.f32 %v1259, %v911
    %v1344 = vmul.f32 %v1149, %v901
    %v1345 = vmul.f32 %v1262, %v911
    %v1346 = vmul.f32 %v1152, %v901
    %v1347 = vmul.f32 %v1265, %v911
    %v1348 = vmul.f32 %v1155, %v901
    %v1349 = vmul.f32 %v1268, %v911
    %v1350 = vmul.f32 %v1158, %v901
    %v1351 = vmul.f32 %v1271, %v911
    %v1352 = vmul.f32 %v1161, %v901
    %v1353 = vmul.f32 %v1274, %v911
    %v1354 = vmul.f32 %v1164, %v901
    %v1355 = vmul.f32 %v1277, %v911
    %v1356 = vmul.f32 %v1167, %v901
    %v1357 = vmul.f32 %v1280, %v911
    %v1358 = vmul.f32 %v1170, %v901
    %v1359 = vmul.f32 %v1283, %v911
    %v1360 = vmul.f32 %v1173, %v901
    %v1361 = vmul.f32 %v1286, %v911
    %v1362 = vmul.f32 %v1176, %v901
    %v1363 = vmul.f32 %v1289, %v911
    %v1364 = vmul.f32 %v1179, %v901
    %v1365 = vmul.f32 %v1292, %v911
    %v1366 = vmul.f32 %v1182, %v901
    %v1367 = vmul.f32 %v1295, %v911
    %v1368 = vmul.f32 %v1185, %v901
    %v1369 = vmul.f32 %v1298, %v911
    %v1370 = vmul.f32 %v1188, %v901
    %v1371 = vmul.f32 %v1301, %v911
    %v1372 = vmul.f32 %v1191, %v901
    %v1373 = vmul.f32 %v1304, %v911
    %v1374 = vmul.f32 %v1194, %v901
    %v1375 = vmul.f32 %v1307, %v911
    %v1376 = vmul.f32 %v1197, %v901
    %v1377 = vmul.f32 %v1310, %v911
    %v1378 = vmul.f32 %v1200, %v901
    %v1379 = vmul.f32 %v1313, %v911
    %v1380 = vmul.f32 %v1203, %v901
    %v1381 = vmul.f32 %v1316, %v911
    %s1382 = scalar_lea.vmem [#allocation8], 512
    %1383 = vst [vmem:[%s1382] sm:$0xff] %v1318
    %1384 = vst [vmem:[%s1382 + $0x8] sm:$0xff] %v1319
    %1385 = vst [vmem:[%s1382 + $0x10] sm:$0xff] %v1320
    %1386 = vst [vmem:[%s1382 + $0x18] sm:$0xff] %v1321
    %1387 = vst [vmem:[%s1382 + $0x20] sm:$0xff] %v1322
    %1388 = vst [vmem:[%s1382 + $0x28] sm:$0xff] %v1323
    %1389 = vst [vmem:[%s1382 + $0x30] sm:$0xff] %v1324
    %1390 = vst [vmem:[%s1382 + $0x38] sm:$0xff] %v1325
    %1391 = vst [vmem:[%s1382 + $0x40] sm:$0xff] %v1326
    %1392 = vst [vmem:[%s1382 + $0x48] sm:$0xff] %v1327
    %1393 = vst [vmem:[%s1382 + $0x50] sm:$0xff] %v1328
    %1394 = vst [vmem:[%s1382 + $0x58] sm:$0xff] %v1329
    %1395 = vst [vmem:[%s1382 + $0x60] sm:$0xff] %v1330
    %1396 = vst [vmem:[%s1382 + $0x68] sm:$0xff] %v1331
    %1397 = vst [vmem:[%s1382 + $0x70] sm:$0xff] %v1332
    %1398 = vst [vmem:[%s1382 + $0x78] sm:$0xff] %v1333
    %1399 = vst [vmem:[%s1382 + $0x80] sm:$0xff] %v1334
    %1400 = vst [vmem:[%s1382 + $0x88] sm:$0xff] %v1335
    %1401 = vst [vmem:[%s1382 + $0x90] sm:$0xff] %v1336
    %1402 = vst [vmem:[%s1382 + $0x98] sm:$0xff] %v1337
    %1403 = vst [vmem:[%s1382 + $0xa0] sm:$0xff] %v1338
    %1404 = vst [vmem:[%s1382 + $0xa8] sm:$0xff] %v1339
    %1405 = vst [vmem:[%s1382 + $0xb0] sm:$0xff] %v1340
    %1406 = vst [vmem:[%s1382 + $0xb8] sm:$0xff] %v1341
    %1407 = vst [vmem:[%s1382 + $0xc0] sm:$0xff] %v1342
    %1408 = vst [vmem:[%s1382 + $0xc8] sm:$0xff] %v1343
    %1409 = vst [vmem:[%s1382 + $0xd0] sm:$0xff] %v1344
    %1410 = vst [vmem:[%s1382 + $0xd8] sm:$0xff] %v1345
    %1411 = vst [vmem:[%s1382 + $0xe0] sm:$0xff] %v1346
    %1412 = vst [vmem:[%s1382 + $0xe8] sm:$0xff] %v1347
    %1413 = vst [vmem:[%s1382 + $0xf0] sm:$0xff] %v1348
    %1414 = vst [vmem:[%s1382 + $0xf8] sm:$0xff] %v1349
    %1415 = vst [vmem:[%s1382 + $0x100] sm:$0xff] %v1350
    %1416 = vst [vmem:[%s1382 + $0x108] sm:$0xff] %v1351
    %1417 = vst [vmem:[%s1382 + $0x110] sm:$0xff] %v1352
    %1418 = vst [vmem:[%s1382 + $0x118] sm:$0xff] %v1353
    %1419 = vst [vmem:[%s1382 + $0x120] sm:$0xff] %v1354
    %1420 = vst [vmem:[%s1382 + $0x128] sm:$0xff] %v1355
    %1421 = vst [vmem:[%s1382 + $0x130] sm:$0xff] %v1356
    %1422 = vst [vmem:[%s1382 + $0x138] sm:$0xff] %v1357
    %1423 = vst [vmem:[%s1382 + $0x140] sm:$0xff] %v1358
    %1424 = vst [vmem:[%s1382 + $0x148] sm:$0xff] %v1359
    %1425 = vst [vmem:[%s1382 + $0x150] sm:$0xff] %v1360
    %1426 = vst [vmem:[%s1382 + $0x158] sm:$0xff] %v1361
    %1427 = vst [vmem:[%s1382 + $0x160] sm:$0xff] %v1362
    %1428 = vst [vmem:[%s1382 + $0x168] sm:$0xff] %v1363
    %1429 = vst [vmem:[%s1382 + $0x170] sm:$0xff] %v1364
    %1430 = vst [vmem:[%s1382 + $0x178] sm:$0xff] %v1365
    %1431 = vst [vmem:[%s1382 + $0x180] sm:$0xff] %v1366
    %1432 = vst [vmem:[%s1382 + $0x188] sm:$0xff] %v1367
    %1433 = vst [vmem:[%s1382 + $0x190] sm:$0xff] %v1368
    %1434 = vst [vmem:[%s1382 + $0x198] sm:$0xff] %v1369
    %1435 = vst [vmem:[%s1382 + $0x1a0] sm:$0xff] %v1370
    %1436 = vst [vmem:[%s1382 + $0x1a8] sm:$0xff] %v1371
    %1437 = vst [vmem:[%s1382 + $0x1b0] sm:$0xff] %v1372
    %1438 = vst [vmem:[%s1382 + $0x1b8] sm:$0xff] %v1373
    %1439 = vst [vmem:[%s1382 + $0x1c0] sm:$0xff] %v1374
    %1440 = vst [vmem:[%s1382 + $0x1c8] sm:$0xff] %v1375
    %1441 = vst [vmem:[%s1382 + $0x1d0] sm:$0xff] %v1376
    %1442 = vst [vmem:[%s1382 + $0x1d8] sm:$0xff] %v1377
    %1443 = vst [vmem:[%s1382 + $0x1e0] sm:$0xff] %v1378
    %1444 = vst [vmem:[%s1382 + $0x1e8] sm:$0xff] %v1379
    %1445 = vst [vmem:[%s1382 + $0x1f0] sm:$0xff] %v1380
    %1446 = vst [vmem:[%s1382 + $0x1f8] sm:$0xff] %v1381
    %v1447 = vmul.f32 %v825, %v825
    %v1449 = vperm.slane %v1447, 0
    %v1450 = vperm.slane %v1447, 1
    %v1453 = vsel %vm696, %v1449, 0.0
    %v1454 = vsel %vm696, %v1450, 0.0
    %v1455 = vadd.f32 %v1453, %v1454
    %1456 = vadd.xlane.f32.xlu0 %v1455
    %v1457 = vpop.xlane.xlu0 %1456
    %v1458 = vrot.slane %v1457, 4
    %v1459 = vadd.f32 %v1457, %v1458
    %v1460 = vrot.slane %v1459, 2
    %v1461 = vadd.f32 %v1459, %v1460
    %v1462 = vrot.slane %v1461, 1
    %v1463 = vadd.f32 %v1461, %v1462
    %s1464 = vtos %v1463
    %s1465 = sadd.f32 %s1464, 1e-05
    %v1467 = vperm.slane %v825, 0
    %v1468 = vperm.slane %v825, 1
    %v1471 = vmul.f32 %v901, %v1467
    %v1472 = vmul.f32 %v911, %v1468
    %v1473 = vperm.slane %v1471, 0
    %v1474 = vperm.slane %v1472, 0
    %v1477 = vrot.slane %v1474, 4
    %v1478 = vsel %vm75, %v1473, %v1477
    %v1480 = vmul.f32 %v821, %v1478
    %1482 = vst [vmem:[#allocation1] ss:$2 sm:$0xff] %v1480
    %v1483 = vld.sshfl [vmem:[#allocation1] sm:$0xff pattern:$0x75316420]
    %v1484 = vld.sshfl [vmem:[#allocation1 + $0x8] sm:$0xff pattern:$0x75316420]
    %v1487 = vsel %vm75, %v1483, 0.0
    %v1488 = vsel %vm75, %v1484, 0.0
    %v1489 = vadd.f32 %v1487, %v1488
    %1490 = vadd.xlane.f32.xlu0 %v1489
    %v1491 = vpop.xlane.xlu0 %1490
    %v1494 = vunpack.c.l.s4 839922192
    %v1495 = vunpack.c.0.s8 %v1494
    %v1496 = vperm.slane %v1491, %v1495
    %v1498 = vmul.f32 %v917, %v1496
    %1500 = vst [vmem:[#allocation1] ss:$2 sm:$0xff] %v1498
    %v1501 = vld.sshfl [vmem:[#allocation1] sm:$0xff pattern:$0x75316420]
    %v1502 = vld.sshfl [vmem:[#allocation1 + $0x8] sm:$0xff pattern:$0x75316420]
    %v1505 = vsel %vm75, %v1501, 0.0
    %v1506 = vrot.slane %v1505, 4
    %v1507 = vadd.f32 %v1505, %v1506
    %v1508 = vrot.slane %v1507, 2
    %v1509 = vadd.f32 %v1507, %v1508
    %v1510 = vrot.slane %v1509, 1
    %v1511 = vadd.f32 %v1509, %v1510
    %v1512 = vsel %vm75, %v1502, 0.0
    %v1513 = vrot.slane %v1512, 4
    %v1514 = vadd.f32 %v1512, %v1513
    %v1515 = vrot.slane %v1514, 2
    %v1516 = vadd.f32 %v1514, %v1515
    %v1517 = vrot.slane %v1516, 1
    %v1518 = vadd.f32 %v1516, %v1517
    %v1519 = vstv %s1465
    %v1520 = vrcp.pop %v1519
    %v1521 = vmul.f32 %v1519, %v1520
    %v1522 = vsub.f32 1.0, %v1521
    %v1523 = vmul.f32 %v1520, %v1522
    %v1524 = vadd.f32 %v1520, %v1523
    %vm1525 = vweird.f32 %v1519
    %vm1526 = vweird.f32 %v1520
    %vm1527 = vmor %vm1525, %vm1526
    %v1528 = vsel %vm1527, %v1520, %v1524
    %v1529 = vand.u32 2147483647, %v1519
    %vm1530 = vcmp.eq.f32.partialorder %v1529, 8.507059e+37
    %v1531 = vand.u32 %v1519, 2147483648
    %v1532 = vor.u32 1.1754944e-38, %v1531
    %v1533 = vsel %vm1530, %v1532, %v1528
    %v1534 = vmul.f32 %v1511, %v1533
    %v1535 = vmul.f32 %v1518, %v1533
    %v1536 = vmin.f32 %v1534, %v1535
    %1537 = vmin.xlane.f32.xlu0 %v1536
    %v1538 = vpop.xlane.xlu0 %1537
    %s1539 = vtos %v1538
    %v1540 = vmax.f32 %v1534, %v1535
    %1541 = vmax.xlane.f32.xlu0 %v1540
    %v1542 = vpop.xlane.xlu0 %1541
    %s1543 = vtos %v1542
    %v1544 = vstv %s1539
    %v1545 = vsub.f32 %v1534, %v1544
    %v1546 = vsub.f32 %v1535, %v1544
    %s1547 = ssub.f32 %s1543, %s1539
    %s1548 = sadd.f32 %s1547, 1e-05
    %v1549 = vstv %s1548
    %v1550 = vrcp.pop %v1549
    %v1551 = vmul.f32 %v1549, %v1550
    %v1552 = vsub.f32 1.0, %v1551
    %v1553 = vmul.f32 %v1550, %v1552
    %v1554 = vadd.f32 %v1550, %v1553
    %vm1555 = vweird.f32 %v1549
    %vm1556 = vweird.f32 %v1550
    %vm1557 = vmor %vm1555, %vm1556
    %v1558 = vsel %vm1557, %v1550, %v1554
    %v1559 = vand.u32 2147483647, %v1549
    %vm1560 = vcmp.eq.f32.partialorder %v1559, 8.507059e+37
    %v1561 = vand.u32 %v1549, 2147483648
    %v1562 = vor.u32 1.1754944e-38, %v1561
    %v1563 = vsel %vm1560, %v1562, %v1558
    %v1564 = vmul.f32 %v1545, %v1563
    %v1565 = vmul.f32 %v1546, %v1563
    %v1568 = vrot.slane %v1565, 7
    %v1569 = vsel %vm696, %v1564, %v1568
    %s1571 = scalar_lea.vmem [#allocation9], 2
    %1572 = vst.msk [vmem:[%s1571] sm:$0x3] %vm818, %v1569
    // Predicated region
    $region26: #{tpu_custom_call.1} parent=1 // pred_check
      _
    $region27: #{tpu_custom_call.1} parent=1 // pred_check_branch
      %1574 = sbr.rel (0) target = $region29
    $region28: #{tpu_custom_call.1} parent=1 // pred_region
      %1576 = vsyncadd [#allocation4], 0
      %s1577 = sshll.u32 [#allocation8], 4
      %s1578 = int_to_ptr.vmem [resolvable:$true] %s1577
      %s1579 = sshll.u32 %s3, 4
      %s1580 = int_to_ptr.hbm [resolvable:$true] %s1579
      %1585 = dma.vmem_to_hbm [thread:$0]  %s1578, 16384, %s1580, [#allocation4], 256, 256, 16
    $region29: #{tpu_custom_call.1} parent=1 // pred_fallthru
      _
    // Predicated region
    $region30: #{tpu_custom_call.1} parent=1 // pred_check
      _
    $region31: #{tpu_custom_call.1} parent=1 // pred_check_branch
      %1587 = sbr.rel (0) target = $region33
    $region32: #{tpu_custom_call.1} parent=1 // pred_region
      %1589 = vsyncadd [#allocation10], 0
      %s1590 = sshll.u32 [#allocation9], 4
      %s1591 = int_to_ptr.vmem [resolvable:$true] %s1590
      %s1592 = sshll.u32 %s4, 4
      %s1593 = int_to_ptr.hbm [resolvable:$true] %s1592
      %1598 = dma.vmem_to_hbm [thread:$0]  %s1591, 64, %s1593, [#allocation10], 32, 32, 2
    $region33: #{tpu_custom_call.1} parent=1 // pred_fallthru
      _
    // Predicated region
    $region34: #{tpu_custom_call.1} parent=1 // pred_check
      _
    $region35: #{tpu_custom_call.1} parent=1 // pred_check_branch
      %1600 = sbr.rel (0) target = $region37
    $region36: #{tpu_custom_call.1} parent=1 // pred_region
      %1602 = dma.done [#allocation4], 16384
    $region37: #{tpu_custom_call.1} parent=1 // pred_fallthru
      _
    // Predicated region
    $region38: #{tpu_custom_call.1} parent=1 // pred_check
      _
    $region39: #{tpu_custom_call.1} parent=1 // pred_check_branch
      %1604 = sbr.rel (0) target = $region41
    $region40: #{tpu_custom_call.1} parent=1 // pred_region
      %1606 = dma.done [#allocation10], 64
    $region41: #{tpu_custom_call.1} parent=1 // pred_fallthru
      _
    %1607 = vsyncpa [#allocation3], 1
    %1608 = vsyncpa [#allocation6], 1
    %1609 = vsyncpa [#allocation4], 1
    %1610 = vsyncpa [#allocation10], 1

</llo_original>
